<compile_context>
chip_gen: v7x
topology: tpu7x:2x2x1
jax: 0.10.0
libtpu: 0.0.40
codegen_flags: <defaults>
</compile_context>

<pallas_src>
import jax
import jax.numpy as jnp
from jax import lax
from jax.experimental import pallas as pl
from jax.experimental.pallas import tpu as pltpu

EPS = 1e-5  # nn.LayerNorm default eps


def _round_up(x, m):
    return ((x + m - 1) // m) * m


def _layernorm(x, gamma, beta):
    # Single-pass variance: mean(x^2) - mean(x)^2 (clamped), rsqrt on the EUP.
    mean = jnp.mean(x, axis=-1, keepdims=True)
    var = jnp.maximum(jnp.mean(x * x, axis=-1, keepdims=True) - mean * mean, 0.0)
    inv = lax.rsqrt(var + EPS)
    return (x - mean) * inv * gamma + beta


def ffmlp_kernel(x_ref, w1_ref, b1_ref, w2_ref, b2_ref,
                 g1_ref, be1_ref, g2_ref, be2_ref, o_ref):
    x = x_ref[...].astype(jnp.float32)                 # (TM, D)

    # Hoist grid-invariant params into vregs once per tile (no per-op reload).
    g1, be1 = g1_ref[...], be1_ref[...]
    g2, be2 = g2_ref[...], be2_ref[...]
    b1, b2 = b1_ref[...], b2_ref[...]

    # --- norm1 (f32) ---
    ss = _layernorm(x, g1, be1)

    # --- linear1 -> relu -> linear2 : bf16 MXU operands, f32 accumulation ---
    h = jnp.dot(ss.astype(jnp.bfloat16), w1_ref[...],
                preferred_element_type=jnp.float32) + b1
    h = jnp.maximum(h, 0.0)                            # ReLU (dropout1 = identity)
    ss2 = jnp.dot(h.astype(jnp.bfloat16), w2_ref[...],
                  preferred_element_type=jnp.float32) + b2

    # --- residual (dropout2 = identity) and norm2 (f32) ---
    y = _layernorm(ss + ss2, g2, be2)

    o_ref[...] = y.astype(o_ref.dtype)


def ffmlp_forward(src, params, tm=128):
    """src: (batch, seq, input_dim) float32.  Returns same shape/dtype."""
    B, S, D = src.shape
    N = B * S
    w1, b1, w2, b2, g1, be1, g2, be2 = params
    FF = w1.shape[1]

    # Row-tile size: multiple of 8 (f32 sublane), no bigger than needed.
    tm = max(8, min(_round_up(tm, 8), _round_up(N, 8)))
    n_tiles = pl.cdiv(N, tm)
    n_pad = n_tiles * tm

    x2d = src.reshape(N, D)
    if n_pad != N:
        x2d = jnp.pad(x2d, ((0, n_pad - N), (0, 0)))   # zero rows are harmless (eps > 0)

    # Resident weights in bf16 (2x MXU throughput, half the VMEM footprint).
    w1b = w1.astype(jnp.bfloat16)
    w2b = w2.astype(jnp.bfloat16)
    # Biases / LN params as (1, X) f32 row vectors (clean lane layout).
    b1r = b1.reshape(1, FF).astype(jnp.float32)
    b2r = b2.reshape(1, D).astype(jnp.float32)
    g1r, be1r = g1.reshape(1, D).astype(jnp.float32), be1.reshape(1, D).astype(jnp.float32)
    g2r, be2r = g2.reshape(1, D).astype(jnp.float32), be2.reshape(1, D).astype(jnp.float32)

    row_spec = pl.BlockSpec((tm, D), lambda i: (i, 0))          # pipelined per tile
    const = lambda shape: pl.BlockSpec(shape, lambda i: (0, 0))  # VMEM-resident

    # VMEM budget: resident bf16 weights + double-buffered in/out row tiles +
    # f32 hidden + small params + headroom; capped at 64 MiB (v7x-safe).
    weights_bytes = 2 * D * FF * 2                       # w1 + w2 in bf16
    param_bytes = (FF + 5 * D) * 4
    act_bytes = 2 * 2 * tm * D * 4 + 2 * tm * FF * 4     # in/out double-buffer + hidden
    vmem_limit = int(min(max(weights_bytes + param_bytes + act_bytes + (8 << 20),
                             32 << 20), 64 << 20))

    flops = 4 * n_pad * D * FF                           # two matmuls, 2*N*D*FF each
    bytes_accessed = 2 * n_pad * D * 4 + weights_bytes + param_bytes

    out2d = pl.pallas_call(
        ffmlp_kernel,
        out_shape=jax.ShapeDtypeStruct((n_pad, D), src.dtype),
        grid=(n_tiles,),
        in_specs=[
            row_spec,          # x        (TM, D)
            const((D, FF)),    # w1 (pre-transposed: y = x @ w1 + b1), bf16
            const((1, FF)),    # b1
            const((FF, D)),    # w2, bf16
            const((1, D)),     # b2
            const((1, D)),     # gamma1
            const((1, D)),     # beta1
            const((1, D)),     # gamma2
            const((1, D)),     # beta2
        ],
        out_specs=row_spec,
        compiler_params=pltpu.CompilerParams(
            dimension_semantics=("parallel",),
            vmem_limit_bytes=vmem_limit,
        ),
        cost_estimate=pl.CostEstimate(
            flops=flops, transcendentals=2 * n_pad, bytes_accessed=bytes_accessed),
    )(x2d, w1b, b1r, w2b, b2r, g1r, be1r, g2r, be2r)

    if n_pad != N:
        out2d = out2d[:N]
    return out2d.reshape(B, S, D)


def init_params(key, input_dim, ff_dim):
    """Deterministic synthetic parameters matching nn.Linear / nn.LayerNorm shapes.
    Linear weights are stored pre-transposed: (in, out)."""
    k1, k2, k3, k4 = jax.random.split(key, 4)
    lim1 = 1.0 / jnp.sqrt(input_dim)
    lim2 = 1.0 / jnp.sqrt(ff_dim)
    w1 = jax.random.uniform(k1, (input_dim, ff_dim), jnp.float32, -lim1, lim1)
    b1 = jax.random.uniform(k2, (ff_dim,), jnp.float32, -lim1, lim1)
    w2 = jax.random.uniform(k3, (ff_dim, input_dim), jnp.float32, -lim2, lim2)
    b2 = jax.random.uniform(k4, (input_dim,), jnp.float32, -lim2, lim2)
    g1 = jnp.ones((input_dim,), jnp.float32)
    be1 = jnp.zeros((input_dim,), jnp.float32)
    g2 = jnp.ones((input_dim,), jnp.float32)
    be2 = jnp.zeros((input_dim,), jnp.float32)
    return (w1, b1, w2, b2, g1, be1, g2, be2)


def _layernorm_ref(x, gamma, beta):
    mean = jnp.mean(x, axis=-1, keepdims=True)
    var = jnp.mean((x - mean) ** 2, axis=-1, keepdims=True)
    return (x - mean) * lax.rsqrt(var + EPS) * gamma + beta


def _reference(src, params):
    w1, b1, w2, b2, g1, be1, g2, be2 = params
    ss = _layernorm_ref(src, g1, be1)
    h = jnp.maximum(ss @ w1 + b1, 0.0)
    ss2 = h @ w2 + b2
    return _layernorm_ref(ss + ss2, g2, be2)


if __name__ == "__main__":
    # Small but lane-dense shapes: D, FF multiples of 128; N=256 rows -> 2 row tiles.
    batch, seq, input_dim, ff_dim = 2, 128, 128, 256
    key = jax.random.PRNGKey(0)
    kx, kp = jax.random.split(key)
    src = jax.random.normal(kx, (batch, seq, input_dim), jnp.float32)
    params = init_params(kp, input_dim, ff_dim)

    out = ffmlp_forward(src, params, tm=128)
    out = jax.block_until_ready(out)

    ref = _reference(src, params)
    assert out.shape == src.shape and out.dtype == src.dtype
    # bf16 MXU operands (f32 accumulation, f32 LayerNorm) -> looser tolerance than pure f32.
    assert jnp.allclose(out, ref, atol=5e-2, rtol=5e-2), float(jnp.max(jnp.abs(out - ref)))

    print("KERNEL_OK")
</pallas_src>

<mosaic_0001>
module attributes {stable_mosaic.version = 11 : i64} {
  func.func @ffmlp_kernel(%arg0: i32, %arg1: memref<128x128xf32, #tpu.memory_space<vmem>>, %arg2: memref<128x256xbf16, #tpu.memory_space<vmem>>, %arg3: memref<1x256xf32, #tpu.memory_space<vmem>>, %arg4: memref<256x128xbf16, #tpu.memory_space<vmem>>, %arg5: memref<1x128xf32, #tpu.memory_space<vmem>>, %arg6: memref<1x128xf32, #tpu.memory_space<vmem>>, %arg7: memref<1x128xf32, #tpu.memory_space<vmem>>, %arg8: memref<1x128xf32, #tpu.memory_space<vmem>>, %arg9: memref<1x128xf32, #tpu.memory_space<vmem>>, %arg10: memref<128x128xf32, #tpu.memory_space<vmem>>) attributes {dimension_semantics = [#tpu.dimension_semantics<parallel>], iteration_bounds = array<i64: 2>, scalar_prefetch = 0 : i64, scratch_operands = 0 : i64, tpu.core_type = #tpu.core_type<tc>, window_params = [{transform_indices = @transform_0, window_bounds = array<i64: 128, 128>}, {pipeline_mode = #tpu.pipeline_mode<synchronous>, transform_indices = @transform_1, window_bounds = array<i64: 128, 256>}, {pipeline_mode = #tpu.pipeline_mode<synchronous>, transform_indices = @transform_2, window_bounds = array<i64: 1, 256>}, {pipeline_mode = #tpu.pipeline_mode<synchronous>, transform_indices = @transform_3, window_bounds = array<i64: 256, 128>}, {pipeline_mode = #tpu.pipeline_mode<synchronous>, transform_indices = @transform_4, window_bounds = array<i64: 1, 128>}, {pipeline_mode = #tpu.pipeline_mode<synchronous>, transform_indices = @transform_5, window_bounds = array<i64: 1, 128>}, {pipeline_mode = #tpu.pipeline_mode<synchronous>, transform_indices = @transform_6, window_bounds = array<i64: 1, 128>}, {pipeline_mode = #tpu.pipeline_mode<synchronous>, transform_indices = @transform_7, window_bounds = array<i64: 1, 128>}, {pipeline_mode = #tpu.pipeline_mode<synchronous>, transform_indices = @transform_8, window_bounds = array<i64: 1, 128>}, {transform_indices = @transform_9, window_bounds = array<i64: 128, 128>}]} {
    %c0 = arith.constant 0 : index
    %c0_0 = arith.constant 0 : index
    %0 = vector.load %arg1[%c0, %c0_0] : memref<128x128xf32, #tpu.memory_space<vmem>>, vector<128x128xf32>
    %c0_1 = arith.constant 0 : index
    %c0_2 = arith.constant 0 : index
    %1 = vector.load %arg6[%c0_1, %c0_2] : memref<1x128xf32, #tpu.memory_space<vmem>>, vector<1x128xf32>
    %c0_3 = arith.constant 0 : index
    %c0_4 = arith.constant 0 : index
    %2 = vector.load %arg7[%c0_3, %c0_4] : memref<1x128xf32, #tpu.memory_space<vmem>>, vector<1x128xf32>
    %c0_5 = arith.constant 0 : index
    %c0_6 = arith.constant 0 : index
    %3 = vector.load %arg8[%c0_5, %c0_6] : memref<1x128xf32, #tpu.memory_space<vmem>>, vector<1x128xf32>
    %c0_7 = arith.constant 0 : index
    %c0_8 = arith.constant 0 : index
    %4 = vector.load %arg9[%c0_7, %c0_8] : memref<1x128xf32, #tpu.memory_space<vmem>>, vector<1x128xf32>
    %c0_9 = arith.constant 0 : index
    %c0_10 = arith.constant 0 : index
    %5 = vector.load %arg3[%c0_9, %c0_10] : memref<1x256xf32, #tpu.memory_space<vmem>>, vector<1x256xf32>
    %c0_11 = arith.constant 0 : index
    %c0_12 = arith.constant 0 : index
    %6 = vector.load %arg5[%c0_11, %c0_12] : memref<1x128xf32, #tpu.memory_space<vmem>>, vector<1x128xf32>
    %cst = arith.constant dense<0.000000e+00> : vector<128xf32>
    %7 = vector.multi_reduction <add>, %0, %cst [1] : vector<128x128xf32> to vector<128xf32>
    %8 = vector.shape_cast %7 : vector<128xf32> to vector<128x1xf32>
    %cst_13 = arith.constant 1.280000e+02 : f32
    %9 = vector.broadcast %cst_13 : f32 to vector<128x1xf32>
    %10 = arith.divf %8, %9 : vector<128x1xf32>
    %11 = arith.mulf %0, %0 : vector<128x128xf32>
    %cst_14 = arith.constant dense<0.000000e+00> : vector<128xf32>
    %12 = vector.multi_reduction <add>, %11, %cst_14 [1] : vector<128x128xf32> to vector<128xf32>
    %13 = vector.shape_cast %12 : vector<128xf32> to vector<128x1xf32>
    %cst_15 = arith.constant 1.280000e+02 : f32
    %14 = vector.broadcast %cst_15 : f32 to vector<128x1xf32>
    %15 = arith.divf %13, %14 : vector<128x1xf32>
    %16 = arith.mulf %10, %10 : vector<128x1xf32>
    %17 = arith.subf %15, %16 : vector<128x1xf32>
    %cst_16 = arith.constant 0.000000e+00 : f32
    %18 = vector.broadcast %cst_16 : f32 to vector<128x1xf32>
    %19 = arith.maximumf %17, %18 : vector<128x1xf32>
    %cst_17 = arith.constant 9.99999974E-6 : f32
    %20 = vector.broadcast %cst_17 : f32 to vector<128x1xf32>
    %21 = arith.addf %19, %20 : vector<128x1xf32>
    %22 = math.rsqrt %21 : vector<128x1xf32>
    %23 = vector.broadcast %10 : vector<128x1xf32> to vector<128x128xf32>
    %24 = arith.subf %0, %23 : vector<128x128xf32>
    %25 = vector.broadcast %22 : vector<128x1xf32> to vector<128x128xf32>
    %26 = arith.mulf %24, %25 : vector<128x128xf32>
    %27 = vector.broadcast %1 : vector<1x128xf32> to vector<128x128xf32>
    %28 = arith.mulf %26, %27 : vector<128x128xf32>
    %29 = vector.broadcast %2 : vector<1x128xf32> to vector<128x128xf32>
    %30 = arith.addf %28, %29 : vector<128x128xf32>
    %31 = arith.truncf %30 : vector<128x128xf32> to vector<128x128xbf16>
    %c0_18 = arith.constant 0 : index
    %c0_19 = arith.constant 0 : index
    %32 = vector.load %arg2[%c0_18, %c0_19] : memref<128x256xbf16, #tpu.memory_space<vmem>>, vector<128x256xbf16>
    %cst_20 = arith.constant dense<0.000000e+00> : vector<128x256xf32>
    %33 = tpu.matmul %31, %32, %cst_20 {dimension_numbers = #tpu.dot_dimension_numbers<[1], [0], [0], [1], [0, 0, 1, 1], [], []>} : vector<128x128xbf16>, vector<128x256xbf16>, vector<128x256xf32> -> vector<128x256xf32>
    %34 = vector.broadcast %5 : vector<1x256xf32> to vector<128x256xf32>
    %35 = arith.addf %33, %34 : vector<128x256xf32>
    %cst_21 = arith.constant 0.000000e+00 : f32
    %36 = vector.broadcast %cst_21 : f32 to vector<128x256xf32>
    %37 = arith.maximumf %35, %36 : vector<128x256xf32>
    %38 = arith.truncf %37 : vector<128x256xf32> to vector<128x256xbf16>
    %c0_22 = arith.constant 0 : index
    %c0_23 = arith.constant 0 : index
    %39 = vector.load %arg4[%c0_22, %c0_23] : memref<256x128xbf16, #tpu.memory_space<vmem>>, vector<256x128xbf16>
    %cst_24 = arith.constant dense<0.000000e+00> : vector<128x128xf32>
    %40 = tpu.matmul %38, %39, %cst_24 {dimension_numbers = #tpu.dot_dimension_numbers<[1], [0], [0], [1], [0, 0, 1, 1], [], []>} : vector<128x256xbf16>, vector<256x128xbf16>, vector<128x128xf32> -> vector<128x128xf32>
    %41 = vector.broadcast %6 : vector<1x128xf32> to vector<128x128xf32>
    %42 = arith.addf %40, %41 : vector<128x128xf32>
    %43 = arith.addf %30, %42 : vector<128x128xf32>
    %cst_25 = arith.constant dense<0.000000e+00> : vector<128xf32>
    %44 = vector.multi_reduction <add>, %43, %cst_25 [1] : vector<128x128xf32> to vector<128xf32>
    %45 = vector.shape_cast %44 : vector<128xf32> to vector<128x1xf32>
    %cst_26 = arith.constant 1.280000e+02 : f32
    %46 = vector.broadcast %cst_26 : f32 to vector<128x1xf32>
    %47 = arith.divf %45, %46 : vector<128x1xf32>
    %48 = arith.mulf %43, %43 : vector<128x128xf32>
    %cst_27 = arith.constant dense<0.000000e+00> : vector<128xf32>
    %49 = vector.multi_reduction <add>, %48, %cst_27 [1] : vector<128x128xf32> to vector<128xf32>
    %50 = vector.shape_cast %49 : vector<128xf32> to vector<128x1xf32>
    %cst_28 = arith.constant 1.280000e+02 : f32
    %51 = vector.broadcast %cst_28 : f32 to vector<128x1xf32>
    %52 = arith.divf %50, %51 : vector<128x1xf32>
    %53 = arith.mulf %47, %47 : vector<128x1xf32>
    %54 = arith.subf %52, %53 : vector<128x1xf32>
    %cst_29 = arith.constant 0.000000e+00 : f32
    %55 = vector.broadcast %cst_29 : f32 to vector<128x1xf32>
    %56 = arith.maximumf %54, %55 : vector<128x1xf32>
    %cst_30 = arith.constant 9.99999974E-6 : f32
    %57 = vector.broadcast %cst_30 : f32 to vector<128x1xf32>
    %58 = arith.addf %56, %57 : vector<128x1xf32>
    %59 = math.rsqrt %58 : vector<128x1xf32>
    %60 = vector.broadcast %47 : vector<128x1xf32> to vector<128x128xf32>
    %61 = arith.subf %43, %60 : vector<128x128xf32>
    %62 = vector.broadcast %59 : vector<128x1xf32> to vector<128x128xf32>
    %63 = arith.mulf %61, %62 : vector<128x128xf32>
    %64 = vector.broadcast %3 : vector<1x128xf32> to vector<128x128xf32>
    %65 = arith.mulf %63, %64 : vector<128x128xf32>
    %66 = vector.broadcast %4 : vector<1x128xf32> to vector<128x128xf32>
    %67 = arith.addf %65, %66 : vector<128x128xf32>
    %c0_31 = arith.constant 0 : index
    %c0_32 = arith.constant 0 : index
    %68 = vector.load %arg10[%c0_31, %c0_32] : memref<128x128xf32, #tpu.memory_space<vmem>>, vector<128x128xf32>
    tpu.vector_store %arg10[%c0_31, %c0_32], %67 {strides = array<i32>} : memref<128x128xf32, #tpu.memory_space<vmem>>, vector<128x128xf32>,
    return
  }
  func.func @transform_0(%arg0: i32) -> (i32, i32) {
    %c0_i32 = arith.constant 0 : i32
    %c0_i32_0 = arith.constant 0 : i32
    return %arg0, %c0_i32 : i32, i32
  }
  func.func @transform_1(%arg0: i32) -> (i32, i32) {
    %c0_i32 = arith.constant 0 : i32
    %c0_i32_0 = arith.constant 0 : i32
    %c0_i32_1 = arith.constant 0 : i32
    return %c0_i32, %c0_i32_0 : i32, i32
  }
  func.func @transform_2(%arg0: i32) -> (i32, i32) {
    %c0_i32 = arith.constant 0 : i32
    %c0_i32_0 = arith.constant 0 : i32
    %c0_i32_1 = arith.constant 0 : i32
    return %c0_i32, %c0_i32_0 : i32, i32
  }
  func.func @transform_3(%arg0: i32) -> (i32, i32) {
    %c0_i32 = arith.constant 0 : i32
    %c0_i32_0 = arith.constant 0 : i32
    %c0_i32_1 = arith.constant 0 : i32
    return %c0_i32, %c0_i32_0 : i32, i32
  }
  func.func @transform_4(%arg0: i32) -> (i32, i32) {
    %c0_i32 = arith.constant 0 : i32
    %c0_i32_0 = arith.constant 0 : i32
    %c0_i32_1 = arith.constant 0 : i32
    return %c0_i32, %c0_i32_0 : i32, i32
  }
  func.func @transform_5(%arg0: i32) -> (i32, i32) {
    %c0_i32 = arith.constant 0 : i32
    %c0_i32_0 = arith.constant 0 : i32
    %c0_i32_1 = arith.constant 0 : i32
    return %c0_i32, %c0_i32_0 : i32, i32
  }
  func.func @transform_6(%arg0: i32) -> (i32, i32) {
    %c0_i32 = arith.constant 0 : i32
    %c0_i32_0 = arith.constant 0 : i32
    %c0_i32_1 = arith.constant 0 : i32
    return %c0_i32, %c0_i32_0 : i32, i32
  }
  func.func @transform_7(%arg0: i32) -> (i32, i32) {
    %c0_i32 = arith.constant 0 : i32
    %c0_i32_0 = arith.constant 0 : i32
    %c0_i32_1 = arith.constant 0 : i32
    return %c0_i32, %c0_i32_0 : i32, i32
  }
  func.func @transform_8(%arg0: i32) -> (i32, i32) {
    %c0_i32 = arith.constant 0 : i32
    %c0_i32_0 = arith.constant 0 : i32
    %c0_i32_1 = arith.constant 0 : i32
    return %c0_i32, %c0_i32_0 : i32, i32
  }
  func.func @transform_9(%arg0: i32) -> (i32, i32) {
    %c0_i32 = arith.constant 0 : i32
    %c0_i32_0 = arith.constant 0 : i32
    return %arg0, %c0_i32 : i32, i32
  }
}

</mosaic_0001>

<llo_original>
// kernel: tpu_custom_call.1
$region0: #{tpu_custom_call.1}
  #allocation0 [shape = 'u32[]', space=smem, size = 0x4, offset = 0x4, fixed_abs, tag = 'smem constant byte address 0x4 - core index']
  #allocation1 [shape = 'u32[144,128]{1,0:T(1,128)}', space=vmem, size = 0x12000, scoped, tag = 'internal scratch']
  %s0 = inlined_call_operand.hbm [shape: f32[256,128], index: 0, kind: input, shape index: {}]
  %s1 = inlined_call_operand.hbm [shape: bf16[128,256], index: 1, kind: input, shape index: {}]
  %s2 = inlined_call_operand.vmem [shape: f32[1,256], index: 2, kind: input, shape index: {}]
  %s3 = inlined_call_operand.hbm [shape: bf16[256,128], index: 3, kind: input, shape index: {}]
  %s4 = inlined_call_operand.vmem [shape: f32[1,128], index: 4, kind: input, shape index: {}]
  %s5 = inlined_call_operand.vmem [shape: f32[1,128], index: 5, kind: input, shape index: {}]
  %s6 = inlined_call_operand.vmem [shape: f32[1,128], index: 6, kind: input, shape index: {}]
  %s7 = inlined_call_operand.vmem [shape: f32[1,128], index: 7, kind: input, shape index: {}]
  %s8 = inlined_call_operand.vmem [shape: f32[1,128], index: 8, kind: input, shape index: {}]
  %s9 = inlined_call_operand.hbm [shape: f32[256,128], index: 9, kind: output, shape index: {}]
  %s10 = sld [smem:[#allocation0]]
  $region81: #{tpu_custom_call.1} parent=0
    _
  %s12 = ssub.s32 1, %s10
  %s13 = scalar_select 0, %s12, %s10
  $region1: #{tpu_custom_call.1} parent=0
    #allocation2 [shape = 'u8[131072]{0}', space=vmem, size = 0x20000, scoped, tag = 'input window, operand 0']
    #allocation3 [shape = 's32[2]{0}', space=sflag, size = 0x8, scoped, tag = 'scoped memory for tpu_custom_call.1']
    #allocation4 [shape = 's32[2]{0}', space=sflag, size = 0x8, scoped, tag = 'scoped memory for tpu_custom_call.1']
    #allocation5 [shape = 'u8[65536]{0}', space=vmem, size = 0x10000, scoped, tag = 'input window, operand 1, single buffered']
    #allocation6 [shape = 's32[1]{0}', space=sflag, size = 0x4, scoped, tag = 'scoped memory for tpu_custom_call.1']
    #allocation7 [shape = 'u8[65536]{0}', space=vmem, size = 0x10000, scoped, tag = 'input window, operand 3, single buffered']
    #allocation8 [shape = 'u8[131072]{0}', space=vmem, size = 0x20000, scoped, tag = 'output window, operand 0']
    %14 = vsyncpa [#allocation3], 0
    %s15 = scalar_lea.sflag [#allocation3], 1
    %16 = vsyncpa %s15, 0
    %17 = vsyncpa [#allocation6], 0
    %18 = vsyncpa [#allocation4], 0
    %s19 = scalar_lea.sflag [#allocation4], 1
    %20 = vsyncpa %s19, 0
    loop: start=0, step=1, limit=4
    $region2: #{tpu_custom_call.1} parent=1 // loop_pre_header
      _
    $region3: #{tpu_custom_call.1} parent=1 // loop_header
      %s22 = sphi 0, %s26
      %p23 = scmp.ge.s32.totalorder %s22, 4
      %s32 = sphi 0, %s34
      %s35 = sphi 0, %s32
      %s36 = sphi 0, %s35
      %s52 = sphi 0, %s36
      %s56 = sphi 0, %s56
      %s58 = sphi 0, %s56
      %s59 = sphi 0, %s58
      %s73 = sphi 0, %s59
      %s77 = sphi 0, %s77
      %s79 = sphi 0, %s77
      %s80 = sphi 0, %s79
      %s94 = sphi 0, %s80
      %s98 = sphi 0, %s98
      %s100 = sphi 0, %s98
      %s101 = sphi 0, %s100
      %s115 = sphi 0, %s101
      %s119 = sphi 0, %s119
      %s121 = sphi 0, %s119
      %s122 = sphi 0, %s121
      %s136 = sphi 0, %s122
      %s140 = sphi 0, %s140
      %s142 = sphi 0, %s140
      %s143 = sphi 0, %s142
      %s157 = sphi 0, %s143
      %s161 = sphi 0, %s161
      %s163 = sphi 0, %s161
      %s164 = sphi 0, %s163
      %s178 = sphi 0, %s164
      %s182 = sphi 0, %s182
      %s184 = sphi 0, %s182
      %s185 = sphi 0, %s184
      %s199 = sphi 0, %s185
      %s203 = sphi 0, %s203
      %s205 = sphi 0, %s203
      %s206 = sphi 0, %s205
      %s220 = sphi 0, %s206
      %s226 = sphi 0, %s228
      %s229 = sphi 0, %s226
      %s230 = sphi 0, %s229
      %s246 = sphi 0, %s230
    $region4: #{tpu_custom_call.1} parent=1 // loop_header_branch
      %25 = sbr.rel (%p23) target = $region8
    $region5: #{tpu_custom_call.1} parent=1 // loop_body
      %s27 = ssub.s32 %s22, 1
      %s28 = ssub.s32 %s22, 2
      %s29 = sadd.s32 %s22, 1
      %s30 = ssub.s32 %s22, %s29
      %p31 = scmp.eq.s32.totalorder %s30, 0
      %s33 = sadd.s32 %s32, 1
      %s34 = scalar_select %p31, %s32, %s33
      %p37 = pneg %p31
      %p38 = scmp.eq.s32.totalorder %s22, 1
      %p39 = por %p37, %p38
      %p40 = scmp.ne.s32.totalorder %s32, %s35
      %p41 = scmp.eq.s32.totalorder %s22, 0
      %p42 = por %p40, %p41
      %p43 = scmp.ne.s32.totalorder %s32, %s35
      %p44 = scmp.eq.s32.totalorder %s27, 1
      %p45 = por %p43, %p44
      %p46 = scmp.ne.s32.totalorder %s35, %s36
      %p47 = scmp.eq.s32.totalorder %s27, 0
      %p48 = por %p46, %p47
      %p49 = scmp.ne.s32.totalorder %s35, %s36
      %p50 = scmp.eq.s32.totalorder %s28, 1
      %p51 = por %p49, %p50
      %p53 = scmp.ne.s32.totalorder %s36, %s52
      %p54 = scmp.eq.s32.totalorder %s28, 0
      %p55 = por %p53, %p54
      %s57 = sadd.s32 %s56, 1
      %p60 = scmp.eq.s32.totalorder %s22, 1
      %p61 = scmp.ne.s32.totalorder %s56, %s58
      %p62 = scmp.eq.s32.totalorder %s22, 0
      %p63 = por %p61, %p62
      %p64 = scmp.ne.s32.totalorder %s56, %s58
      %p65 = scmp.eq.s32.totalorder %s27, 1
      %p66 = por %p64, %p65
      %p67 = scmp.ne.s32.totalorder %s58, %s59
      %p68 = scmp.eq.s32.totalorder %s27, 0
      %p69 = por %p67, %p68
      %p70 = scmp.ne.s32.totalorder %s58, %s59
      %p71 = scmp.eq.s32.totalorder %s28, 1
      %p72 = por %p70, %p71
      %p74 = scmp.ne.s32.totalorder %s59, %s73
      %p75 = scmp.eq.s32.totalorder %s28, 0
      %p76 = por %p74, %p75
      %s78 = sadd.s32 %s77, 1
      %p81 = scmp.eq.s32.totalorder %s22, 1
      %p82 = scmp.ne.s32.totalorder %s77, %s79
      %p83 = scmp.eq.s32.totalorder %s22, 0
      %p84 = por %p82, %p83
      %p85 = scmp.ne.s32.totalorder %s77, %s79
      %p86 = scmp.eq.s32.totalorder %s27, 1
      %p87 = por %p85, %p86
      %p88 = scmp.ne.s32.totalorder %s79, %s80
      %p89 = scmp.eq.s32.totalorder %s27, 0
      %p90 = por %p88, %p89
      %p91 = scmp.ne.s32.totalorder %s79, %s80
      %p92 = scmp.eq.s32.totalorder %s28, 1
      %p93 = por %p91, %p92
      %p95 = scmp.ne.s32.totalorder %s80, %s94
      %p96 = scmp.eq.s32.totalorder %s28, 0
      %p97 = por %p95, %p96
      %s99 = sadd.s32 %s98, 1
      %p102 = scmp.eq.s32.totalorder %s22, 1
      %p103 = scmp.ne.s32.totalorder %s98, %s100
      %p104 = scmp.eq.s32.totalorder %s22, 0
      %p105 = por %p103, %p104
      %p106 = scmp.ne.s32.totalorder %s98, %s100
      %p107 = scmp.eq.s32.totalorder %s27, 1
      %p108 = por %p106, %p107
      %p109 = scmp.ne.s32.totalorder %s100, %s101
      %p110 = scmp.eq.s32.totalorder %s27, 0
      %p111 = por %p109, %p110
      %p112 = scmp.ne.s32.totalorder %s100, %s101
      %p113 = scmp.eq.s32.totalorder %s28, 1
      %p114 = por %p112, %p113
      %p116 = scmp.ne.s32.totalorder %s101, %s115
      %p117 = scmp.eq.s32.totalorder %s28, 0
      %p118 = por %p116, %p117
      %s120 = sadd.s32 %s119, 1
      %p123 = scmp.eq.s32.totalorder %s22, 1
      %p124 = scmp.ne.s32.totalorder %s119, %s121
      %p125 = scmp.eq.s32.totalorder %s22, 0
      %p126 = por %p124, %p125
      %p127 = scmp.ne.s32.totalorder %s119, %s121
      %p128 = scmp.eq.s32.totalorder %s27, 1
      %p129 = por %p127, %p128
      %p130 = scmp.ne.s32.totalorder %s121, %s122
      %p131 = scmp.eq.s32.totalorder %s27, 0
      %p132 = por %p130, %p131
      %p133 = scmp.ne.s32.totalorder %s121, %s122
      %p134 = scmp.eq.s32.totalorder %s28, 1
      %p135 = por %p133, %p134
      %p137 = scmp.ne.s32.totalorder %s122, %s136
      %p138 = scmp.eq.s32.totalorder %s28, 0
      %p139 = por %p137, %p138
      %s141 = sadd.s32 %s140, 1
      %p144 = scmp.eq.s32.totalorder %s22, 1
      %p145 = scmp.ne.s32.totalorder %s140, %s142
      %p146 = scmp.eq.s32.totalorder %s22, 0
      %p147 = por %p145, %p146
      %p148 = scmp.ne.s32.totalorder %s140, %s142
      %p149 = scmp.eq.s32.totalorder %s27, 1
      %p150 = por %p148, %p149
      %p151 = scmp.ne.s32.totalorder %s142, %s143
      %p152 = scmp.eq.s32.totalorder %s27, 0
      %p153 = por %p151, %p152
      %p154 = scmp.ne.s32.totalorder %s142, %s143
      %p155 = scmp.eq.s32.totalorder %s28, 1
      %p156 = por %p154, %p155
      %p158 = scmp.ne.s32.totalorder %s143, %s157
      %p159 = scmp.eq.s32.totalorder %s28, 0
      %p160 = por %p158, %p159
      %s162 = sadd.s32 %s161, 1
      %p165 = scmp.eq.s32.totalorder %s22, 1
      %p166 = scmp.ne.s32.totalorder %s161, %s163
      %p167 = scmp.eq.s32.totalorder %s22, 0
      %p168 = por %p166, %p167
      %p169 = scmp.ne.s32.totalorder %s161, %s163
      %p170 = scmp.eq.s32.totalorder %s27, 1
      %p171 = por %p169, %p170
      %p172 = scmp.ne.s32.totalorder %s163, %s164
      %p173 = scmp.eq.s32.totalorder %s27, 0
      %p174 = por %p172, %p173
      %p175 = scmp.ne.s32.totalorder %s163, %s164
      %p176 = scmp.eq.s32.totalorder %s28, 1
      %p177 = por %p175, %p176
      %p179 = scmp.ne.s32.totalorder %s164, %s178
      %p180 = scmp.eq.s32.totalorder %s28, 0
      %p181 = por %p179, %p180
      %s183 = sadd.s32 %s182, 1
      %p186 = scmp.eq.s32.totalorder %s22, 1
      %p187 = scmp.ne.s32.totalorder %s182, %s184
      %p188 = scmp.eq.s32.totalorder %s22, 0
      %p189 = por %p187, %p188
      %p190 = scmp.ne.s32.totalorder %s182, %s184
      %p191 = scmp.eq.s32.totalorder %s27, 1
      %p192 = por %p190, %p191
      %p193 = scmp.ne.s32.totalorder %s184, %s185
      %p194 = scmp.eq.s32.totalorder %s27, 0
      %p195 = por %p193, %p194
      %p196 = scmp.ne.s32.totalorder %s184, %s185
      %p197 = scmp.eq.s32.totalorder %s28, 1
      %p198 = por %p196, %p197
      %p200 = scmp.ne.s32.totalorder %s185, %s199
      %p201 = scmp.eq.s32.totalorder %s28, 0
      %p202 = por %p200, %p201
      %s204 = sadd.s32 %s203, 1
      %p207 = scmp.eq.s32.totalorder %s22, 1
      %p208 = scmp.ne.s32.totalorder %s203, %s205
      %p209 = scmp.eq.s32.totalorder %s22, 0
      %p210 = por %p208, %p209
      %p211 = scmp.ne.s32.totalorder %s203, %s205
      %p212 = scmp.eq.s32.totalorder %s27, 1
      %p213 = por %p211, %p212
      %p214 = scmp.ne.s32.totalorder %s205, %s206
      %p215 = scmp.eq.s32.totalorder %s27, 0
      %p216 = por %p214, %p215
      %p217 = scmp.ne.s32.totalorder %s205, %s206
      %p218 = scmp.eq.s32.totalorder %s28, 1
      %p219 = por %p217, %p218
      %p221 = scmp.ne.s32.totalorder %s206, %s220
      %p222 = scmp.eq.s32.totalorder %s28, 0
      %p223 = por %p221, %p222
      %s224 = ssub.s32 %s22, %s29
      %p225 = scmp.eq.s32.totalorder %s224, 0
      %s227 = sadd.s32 %s226, 1
      %s228 = scalar_select %p225, %s226, %s227
      %p231 = pneg %p225
      %p232 = scmp.eq.s32.totalorder %s22, 1
      %p233 = por %p231, %p232
      %p234 = scmp.ne.s32.totalorder %s226, %s229
      %p235 = scmp.eq.s32.totalorder %s22, 0
      %p236 = por %p234, %p235
      %p237 = scmp.ne.s32.totalorder %s226, %s229
      %p238 = scmp.eq.s32.totalorder %s27, 1
      %p239 = por %p237, %p238
      %p240 = scmp.ne.s32.totalorder %s229, %s230
      %p241 = scmp.eq.s32.totalorder %s27, 0
      %p242 = por %p240, %p241
      %p243 = scmp.ne.s32.totalorder %s229, %s230
      %p244 = scmp.eq.s32.totalorder %s28, 1
      %p245 = por %p243, %p244
      %p247 = scmp.ne.s32.totalorder %s230, %s246
      %p248 = scmp.eq.s32.totalorder %s28, 0
      %p249 = por %p247, %p248
      %p250 = scmp.le.s32.totalorder 1, %s22
      %p251 = scmp.lt.s32.totalorder %s22, 3
      %p252 = pnand %p250, %p251
      %p253 = pneg %p252
      // Predicated region
      $region9: #{tpu_custom_call.1} parent=5 // pred_check
        _
      $region10: #{tpu_custom_call.1} parent=5 // pred_check_branch
        %255 = sbr.rel (%p252) target = $region12
      $region11: #{tpu_custom_call.1} parent=5 // pred_region
        %s256 = ssub.s32 %s22, 1
        // Predicated region
        $region13: #{tpu_custom_call.1} parent=11 // pred_check
          %p257 = pneg %p69
        $region14: #{tpu_custom_call.1} parent=11 // pred_check_branch
          %259 = sbr.rel (%p257) target = $region16
        $region15: #{tpu_custom_call.1} parent=11 // pred_region
          %s261 = ssub.s32 2048, 2048
          %262 = vsyncadd [#allocation6], %s261
          %s263 = sshll.u32 [#allocation5], 4
          %s264 = int_to_ptr.vmem [resolvable:$true] %s263
          %269 = dma.hbm_to_vmem [thread:$0]  %s1, 2048, %s264, [#allocation6], 128, 128, 8
        $region16: #{tpu_custom_call.1} parent=11 // pred_fallthru
          _
        // Predicated region
        $region17: #{tpu_custom_call.1} parent=11 // pred_check
          %p270 = pneg %p90
        $region18: #{tpu_custom_call.1} parent=11 // pred_check_branch
          %272 = sbr.rel (%p270) target = $region20
        $region19: #{tpu_custom_call.1} parent=11 // pred_region
          _
        $region20: #{tpu_custom_call.1} parent=11 // pred_fallthru
          _
        // Predicated region
        $region21: #{tpu_custom_call.1} parent=11 // pred_check
          %p273 = pneg %p111
        $region22: #{tpu_custom_call.1} parent=11 // pred_check_branch
          %275 = sbr.rel (%p273) target = $region24
        $region23: #{tpu_custom_call.1} parent=11 // pred_region
          %s277 = ssub.s32 2048, 2048
          %278 = vsyncadd [#allocation6], %s277
          %s279 = sshll.u32 [#allocation7], 4
          %s280 = int_to_ptr.vmem [resolvable:$true] %s279
          %285 = dma.hbm_to_vmem [thread:$0]  %s3, 2048, %s280, [#allocation6], 64, 64, 4
        $region24: #{tpu_custom_call.1} parent=11 // pred_fallthru
          _
        // Predicated region
        $region25: #{tpu_custom_call.1} parent=11 // pred_check
          %p286 = pneg %p132
        $region26: #{tpu_custom_call.1} parent=11 // pred_check_branch
          %288 = sbr.rel (%p286) target = $region28
        $region27: #{tpu_custom_call.1} parent=11 // pred_region
          _
        $region28: #{tpu_custom_call.1} parent=11 // pred_fallthru
          _
        // Predicated region
        $region29: #{tpu_custom_call.1} parent=11 // pred_check
          %p289 = pneg %p153
        $region30: #{tpu_custom_call.1} parent=11 // pred_check_branch
          %291 = sbr.rel (%p289) target = $region32
        $region31: #{tpu_custom_call.1} parent=11 // pred_region
          _
        $region32: #{tpu_custom_call.1} parent=11 // pred_fallthru
          _
        // Predicated region
        $region33: #{tpu_custom_call.1} parent=11 // pred_check
          %p292 = pneg %p174
        $region34: #{tpu_custom_call.1} parent=11 // pred_check_branch
          %294 = sbr.rel (%p292) target = $region36
        $region35: #{tpu_custom_call.1} parent=11 // pred_region
          _
        $region36: #{tpu_custom_call.1} parent=11 // pred_fallthru
          _
        // Predicated region
        $region37: #{tpu_custom_call.1} parent=11 // pred_check
          %p295 = pneg %p195
        $region38: #{tpu_custom_call.1} parent=11 // pred_check_branch
          %297 = sbr.rel (%p295) target = $region40
        $region39: #{tpu_custom_call.1} parent=11 // pred_region
          _
        $region40: #{tpu_custom_call.1} parent=11 // pred_fallthru
          _
        // Predicated region
        $region41: #{tpu_custom_call.1} parent=11 // pred_check
          %p298 = pneg %p216
        $region42: #{tpu_custom_call.1} parent=11 // pred_check_branch
          %300 = sbr.rel (%p298) target = $region44
        $region43: #{tpu_custom_call.1} parent=11 // pred_region
          _
        $region44: #{tpu_custom_call.1} parent=11 // pred_fallthru
          _
      $region12: #{tpu_custom_call.1} parent=5 // pred_fallthru
        _
      %p301 = scmp.lt.s32.totalorder %s22, 2
      // Predicated region
      $region45: #{tpu_custom_call.1} parent=5 // pred_check
        %p302 = pneg %p301
      $region46: #{tpu_custom_call.1} parent=5 // pred_check_branch
        %304 = sbr.rel (%p302) target = $region48
      $region47: #{tpu_custom_call.1} parent=5 // pred_region
        // Predicated region
        $region49: #{tpu_custom_call.1} parent=47 // pred_check
          %p305 = pneg %p42
        $region50: #{tpu_custom_call.1} parent=47 // pred_check_branch
          %307 = sbr.rel (%p305) target = $region52
        $region51: #{tpu_custom_call.1} parent=47 // pred_region
          %s308 = sand.u32 %s32, 1
          %s309 = scalar_lea.sflag [#allocation3], %s308
          %s310 = sand.u32 %s32, 1
          %s311 = smul.addr %s310, 128
          %s312 = scalar_lea.vmem [#allocation2], %s311
          %s313 = smul.u32 16, %s22
          %s315 = ssub.s32 2048, 2048
          %316 = vsyncadd %s309, %s315
          %s317 = smul.addr %s313, 128
          %s318 = scalar_lea.hbm %s0, %s317
          %s319 = sshll.u32 %s312, 4
          %s320 = int_to_ptr.vmem [resolvable:$true] %s319
          %325 = dma.hbm_to_vmem [thread:$0]  %s318, 2048, %s320, %s309, 128, 128, 8
        $region52: #{tpu_custom_call.1} parent=47 // pred_fallthru
          _
      $region48: #{tpu_custom_call.1} parent=5 // pred_fallthru
        _
      %p326 = scmp.le.s32.totalorder 1, %s22
      %p327 = scmp.lt.s32.totalorder %s22, 3
      %p328 = pnand %p326, %p327
      %p329 = pneg %p328
      // Predicated region
      $region53: #{tpu_custom_call.1} parent=5 // pred_check
        _
      $region54: #{tpu_custom_call.1} parent=5 // pred_check_branch
        %331 = sbr.rel (%p328) target = $region56
      $region55: #{tpu_custom_call.1} parent=5 // pred_region
        %s332 = ssub.s32 %s22, 1
        %s333 = sand.u32 %s35, 1
        %s334 = scalar_lea.sflag [#allocation3], %s333
        %s335 = sand.u32 %s35, 1
        %s336 = smul.addr %s335, 128
        %s337 = scalar_lea.vmem [#allocation2], %s336
        // Predicated region
        $region57: #{tpu_custom_call.1} parent=55 // pred_check
          %p338 = pneg %p48
        $region58: #{tpu_custom_call.1} parent=55 // pred_check_branch
          %340 = sbr.rel (%p338) target = $region60
        $region59: #{tpu_custom_call.1} parent=55 // pred_region
          %341 = dma.done %s334, 2048
        $region60: #{tpu_custom_call.1} parent=55 // pred_fallthru
          _
        // Predicated region
        $region61: #{tpu_custom_call.1} parent=55 // pred_check
          %p342 = pneg %p69
        $region62: #{tpu_custom_call.1} parent=55 // pred_check_branch
          %344 = sbr.rel (%p342) target = $region64
        $region63: #{tpu_custom_call.1} parent=55 // pred_region
          %345 = dma.done [#allocation6], 2048
        $region64: #{tpu_custom_call.1} parent=55 // pred_fallthru
          _
        // Predicated region
        $region65: #{tpu_custom_call.1} parent=55 // pred_check
          %p346 = pneg %p111
        $region66: #{tpu_custom_call.1} parent=55 // pred_check_branch
          %348 = sbr.rel (%p346) target = $region68
        $region67: #{tpu_custom_call.1} parent=55 // pred_region
          %349 = dma.done [#allocation6], 2048
        $region68: #{tpu_custom_call.1} parent=55 // pred_fallthru
          _
        %s350 = sand.u32 %s35, 1
        %s351 = scalar_lea.sflag [#allocation3], %s350
        %s352 = sand.u32 %s35, 1
        %s353 = smul.addr %s352, 128
        %s354 = scalar_lea.vmem [#allocation2], %s353
        %p355 = pneg %p48
        %p356 = pneg %p45
        %p357 = pneg %p69
        %p358 = pneg %p66
        %p359 = pneg %p90
        %p360 = pneg %p87
        %p361 = pneg %p111
        %p362 = pneg %p108
        %p363 = pneg %p132
        %p364 = pneg %p129
        %p365 = pneg %p153
        %p366 = pneg %p150
        %p367 = pneg %p174
        %p368 = pneg %p171
        %p369 = pneg %p195
        %p370 = pneg %p192
        %p371 = pneg %p216
        %p372 = pneg %p213
        %p373 = pneg %p242
        %p374 = pneg %p239
        %s375 = sand.u32 %s229, 1
        %s376 = scalar_lea.sflag [#allocation4], %s375
        %s377 = sand.u32 %s229, 1
        %s378 = smul.addr %s377, 128
        %s379 = scalar_lea.vmem [#allocation8], %s378
        %s380 = smul.u32 16, %s27
        %s381 = smul.u32 16, %s27
        %v383 = vld [vmem:[%s337] sm:$0xff]
        %v384 = vld [vmem:[%s337 + $0x8] sm:$0xff]
        %v385 = vld [vmem:[%s337 + $0x10] sm:$0xff]
        %v386 = vld [vmem:[%s337 + $0x18] sm:$0xff]
        %v387 = vld [vmem:[%s337 + $0x20] sm:$0xff]
        %v388 = vld [vmem:[%s337 + $0x28] sm:$0xff]
        %v389 = vld [vmem:[%s337 + $0x30] sm:$0xff]
        %v390 = vld [vmem:[%s337 + $0x38] sm:$0xff]
        %v391 = vld [vmem:[%s337 + $0x40] sm:$0xff]
        %v392 = vld [vmem:[%s337 + $0x48] sm:$0xff]
        %v393 = vld [vmem:[%s337 + $0x50] sm:$0xff]
        %v394 = vld [vmem:[%s337 + $0x58] sm:$0xff]
        %v395 = vld [vmem:[%s337 + $0x60] sm:$0xff]
        %v396 = vld [vmem:[%s337 + $0x68] sm:$0xff]
        %v397 = vld [vmem:[%s337 + $0x70] sm:$0xff]
        %v398 = vld [vmem:[%s337 + $0x78] sm:$0xff]
        %v399 = vld [vmem:[%s5] sm:$0x1]
        %v400 = vld [vmem:[%s6] sm:$0x1]
        %v401 = vld [vmem:[%s7] sm:$0x1]
        %v402 = vld [vmem:[%s8] sm:$0x1]
        %v403 = vld [vmem:[%s2] sm:$0x3]
        %v404 = vld [vmem:[%s4] sm:$0x1]
        %405 = vadd.xlane.f32.xlu0 %v383
        %v406 = vpop.xlane.xlu0 %405
        %407 = vadd.xlane.f32.xlu0 %v384
        %v408 = vpop.xlane.xlu0 %407
        %409 = vadd.xlane.f32.xlu0 %v385
        %v410 = vpop.xlane.xlu0 %409
        %411 = vadd.xlane.f32.xlu0 %v386
        %v412 = vpop.xlane.xlu0 %411
        %413 = vadd.xlane.f32.xlu0 %v387
        %v414 = vpop.xlane.xlu0 %413
        %415 = vadd.xlane.f32.xlu0 %v388
        %v416 = vpop.xlane.xlu0 %415
        %417 = vadd.xlane.f32.xlu0 %v389
        %v418 = vpop.xlane.xlu0 %417
        %419 = vadd.xlane.f32.xlu0 %v390
        %v420 = vpop.xlane.xlu0 %419
        %421 = vadd.xlane.f32.xlu0 %v391
        %v422 = vpop.xlane.xlu0 %421
        %423 = vadd.xlane.f32.xlu0 %v392
        %v424 = vpop.xlane.xlu0 %423
        %425 = vadd.xlane.f32.xlu0 %v393
        %v426 = vpop.xlane.xlu0 %425
        %427 = vadd.xlane.f32.xlu0 %v394
        %v428 = vpop.xlane.xlu0 %427
        %429 = vadd.xlane.f32.xlu0 %v395
        %v430 = vpop.xlane.xlu0 %429
        %431 = vadd.xlane.f32.xlu0 %v396
        %v432 = vpop.xlane.xlu0 %431
        %433 = vadd.xlane.f32.xlu0 %v397
        %v434 = vpop.xlane.xlu0 %433
        %435 = vadd.xlane.f32.xlu0 %v398
        %v436 = vpop.xlane.xlu0 %435
        %v437 = vrcp.pop 128.0
        %v438 = vmul.f32 %v406, %v437
        %v439 = vmul.f32 %v408, %v437
        %v440 = vmul.f32 %v410, %v437
        %v441 = vmul.f32 %v412, %v437
        %v442 = vmul.f32 %v414, %v437
        %v443 = vmul.f32 %v416, %v437
        %v444 = vmul.f32 %v418, %v437
        %v445 = vmul.f32 %v420, %v437
        %v446 = vmul.f32 %v422, %v437
        %v447 = vmul.f32 %v424, %v437
        %v448 = vmul.f32 %v426, %v437
        %v449 = vmul.f32 %v428, %v437
        %v450 = vmul.f32 %v430, %v437
        %v451 = vmul.f32 %v432, %v437
        %v452 = vmul.f32 %v434, %v437
        %v453 = vmul.f32 %v436, %v437
        %v454 = vmul.f32 %v383, %v383
        %v455 = vmul.f32 %v384, %v384
        %v456 = vmul.f32 %v385, %v385
        %v457 = vmul.f32 %v386, %v386
        %v458 = vmul.f32 %v387, %v387
        %v459 = vmul.f32 %v388, %v388
        %v460 = vmul.f32 %v389, %v389
        %v461 = vmul.f32 %v390, %v390
        %v462 = vmul.f32 %v391, %v391
        %v463 = vmul.f32 %v392, %v392
        %v464 = vmul.f32 %v393, %v393
        %v465 = vmul.f32 %v394, %v394
        %v466 = vmul.f32 %v395, %v395
        %v467 = vmul.f32 %v396, %v396
        %v468 = vmul.f32 %v397, %v397
        %v469 = vmul.f32 %v398, %v398
        %470 = vadd.xlane.f32.xlu0 %v454
        %v471 = vpop.xlane.xlu0 %470
        %472 = vadd.xlane.f32.xlu0 %v455
        %v473 = vpop.xlane.xlu0 %472
        %474 = vadd.xlane.f32.xlu0 %v456
        %v475 = vpop.xlane.xlu0 %474
        %476 = vadd.xlane.f32.xlu0 %v457
        %v477 = vpop.xlane.xlu0 %476
        %478 = vadd.xlane.f32.xlu0 %v458
        %v479 = vpop.xlane.xlu0 %478
        %480 = vadd.xlane.f32.xlu0 %v459
        %v481 = vpop.xlane.xlu0 %480
        %482 = vadd.xlane.f32.xlu0 %v460
        %v483 = vpop.xlane.xlu0 %482
        %484 = vadd.xlane.f32.xlu0 %v461
        %v485 = vpop.xlane.xlu0 %484
        %486 = vadd.xlane.f32.xlu0 %v462
        %v487 = vpop.xlane.xlu0 %486
        %488 = vadd.xlane.f32.xlu0 %v463
        %v489 = vpop.xlane.xlu0 %488
        %490 = vadd.xlane.f32.xlu0 %v464
        %v491 = vpop.xlane.xlu0 %490
        %492 = vadd.xlane.f32.xlu0 %v465
        %v493 = vpop.xlane.xlu0 %492
        %494 = vadd.xlane.f32.xlu0 %v466
        %v495 = vpop.xlane.xlu0 %494
        %496 = vadd.xlane.f32.xlu0 %v467
        %v497 = vpop.xlane.xlu0 %496
        %498 = vadd.xlane.f32.xlu0 %v468
        %v499 = vpop.xlane.xlu0 %498
        %500 = vadd.xlane.f32.xlu0 %v469
        %v501 = vpop.xlane.xlu0 %500
        %v502 = vmul.f32 %v471, %v437
        %v503 = vmul.f32 %v473, %v437
        %v504 = vmul.f32 %v475, %v437
        %v505 = vmul.f32 %v477, %v437
        %v506 = vmul.f32 %v479, %v437
        %v507 = vmul.f32 %v481, %v437
        %v508 = vmul.f32 %v483, %v437
        %v509 = vmul.f32 %v485, %v437
        %v510 = vmul.f32 %v487, %v437
        %v511 = vmul.f32 %v489, %v437
        %v512 = vmul.f32 %v491, %v437
        %v513 = vmul.f32 %v493, %v437
        %v514 = vmul.f32 %v495, %v437
        %v515 = vmul.f32 %v497, %v437
        %v516 = vmul.f32 %v499, %v437
        %v517 = vmul.f32 %v501, %v437
        %v518 = vmul.f32 %v438, %v438
        %v519 = vmul.f32 %v439, %v439
        %v520 = vmul.f32 %v440, %v440
        %v521 = vmul.f32 %v441, %v441
        %v522 = vmul.f32 %v442, %v442
        %v523 = vmul.f32 %v443, %v443
        %v524 = vmul.f32 %v444, %v444
        %v525 = vmul.f32 %v445, %v445
        %v526 = vmul.f32 %v446, %v446
        %v527 = vmul.f32 %v447, %v447
        %v528 = vmul.f32 %v448, %v448
        %v529 = vmul.f32 %v449, %v449
        %v530 = vmul.f32 %v450, %v450
        %v531 = vmul.f32 %v451, %v451
        %v532 = vmul.f32 %v452, %v452
        %v533 = vmul.f32 %v453, %v453
        %v534 = vsub.f32 %v502, %v518
        %v535 = vsub.f32 %v503, %v519
        %v536 = vsub.f32 %v504, %v520
        %v537 = vsub.f32 %v505, %v521
        %v538 = vsub.f32 %v506, %v522
        %v539 = vsub.f32 %v507, %v523
        %v540 = vsub.f32 %v508, %v524
        %v541 = vsub.f32 %v509, %v525
        %v542 = vsub.f32 %v510, %v526
        %v543 = vsub.f32 %v511, %v527
        %v544 = vsub.f32 %v512, %v528
        %v545 = vsub.f32 %v513, %v529
        %v546 = vsub.f32 %v514, %v530
        %v547 = vsub.f32 %v515, %v531
        %v548 = vsub.f32 %v516, %v532
        %v549 = vsub.f32 %v517, %v533
        %v550 = vmax.f32 %v534, 0.0
        %v551 = vmax.f32 %v535, 0.0
        %v552 = vmax.f32 %v536, 0.0
        %v553 = vmax.f32 %v537, 0.0
        %v554 = vmax.f32 %v538, 0.0
        %v555 = vmax.f32 %v539, 0.0
        %v556 = vmax.f32 %v540, 0.0
        %v557 = vmax.f32 %v541, 0.0
        %v558 = vmax.f32 %v542, 0.0
        %v559 = vmax.f32 %v543, 0.0
        %v560 = vmax.f32 %v544, 0.0
        %v561 = vmax.f32 %v545, 0.0
        %v562 = vmax.f32 %v546, 0.0
        %v563 = vmax.f32 %v547, 0.0
        %v564 = vmax.f32 %v548, 0.0
        %v565 = vmax.f32 %v549, 0.0
        %v566 = vadd.f32 %v550, 1e-05
        %v567 = vadd.f32 %v551, 1e-05
        %v568 = vadd.f32 %v552, 1e-05
        %v569 = vadd.f32 %v553, 1e-05
        %v570 = vadd.f32 %v554, 1e-05
        %v571 = vadd.f32 %v555, 1e-05
        %v572 = vadd.f32 %v556, 1e-05
        %v573 = vadd.f32 %v557, 1e-05
        %v574 = vadd.f32 %v558, 1e-05
        %v575 = vadd.f32 %v559, 1e-05
        %v576 = vadd.f32 %v560, 1e-05
        %v577 = vadd.f32 %v561, 1e-05
        %v578 = vadd.f32 %v562, 1e-05
        %v579 = vadd.f32 %v563, 1e-05
        %v580 = vadd.f32 %v564, 1e-05
        %v581 = vadd.f32 %v565, 1e-05
        %v582 = vrsqrt.pop %v566
        %v583 = vrsqrt.pop %v567
        %v584 = vrsqrt.pop %v568
        %v585 = vrsqrt.pop %v569
        %v586 = vrsqrt.pop %v570
        %v587 = vrsqrt.pop %v571
        %v588 = vrsqrt.pop %v572
        %v589 = vrsqrt.pop %v573
        %v590 = vrsqrt.pop %v574
        %v591 = vrsqrt.pop %v575
        %v592 = vrsqrt.pop %v576
        %v593 = vrsqrt.pop %v577
        %v594 = vrsqrt.pop %v578
        %v595 = vrsqrt.pop %v579
        %v596 = vrsqrt.pop %v580
        %v597 = vrsqrt.pop %v581
        %v598 = vsub.f32 %v383, %v438
        %v599 = vsub.f32 %v384, %v439
        %v600 = vsub.f32 %v385, %v440
        %v601 = vsub.f32 %v386, %v441
        %v602 = vsub.f32 %v387, %v442
        %v603 = vsub.f32 %v388, %v443
        %v604 = vsub.f32 %v389, %v444
        %v605 = vsub.f32 %v390, %v445
        %v606 = vsub.f32 %v391, %v446
        %v607 = vsub.f32 %v392, %v447
        %v608 = vsub.f32 %v393, %v448
        %v609 = vsub.f32 %v394, %v449
        %v610 = vsub.f32 %v395, %v450
        %v611 = vsub.f32 %v396, %v451
        %v612 = vsub.f32 %v397, %v452
        %v613 = vsub.f32 %v398, %v453
        %v614 = vmul.f32 %v598, %v582
        %v615 = vmul.f32 %v599, %v583
        %v616 = vmul.f32 %v600, %v584
        %v617 = vmul.f32 %v601, %v585
        %v618 = vmul.f32 %v602, %v586
        %v619 = vmul.f32 %v603, %v587
        %v620 = vmul.f32 %v604, %v588
        %v621 = vmul.f32 %v605, %v589
        %v622 = vmul.f32 %v606, %v590
        %v623 = vmul.f32 %v607, %v591
        %v624 = vmul.f32 %v608, %v592
        %v625 = vmul.f32 %v609, %v593
        %v626 = vmul.f32 %v610, %v594
        %v627 = vmul.f32 %v611, %v595
        %v628 = vmul.f32 %v612, %v596
        %v629 = vmul.f32 %v613, %v597
        %v631 = vlaneseq
        %v632 = vshrl.u32 %v631, 7
        %v633 = vsub.s32 0, %v632
        %v634 = vrot.slane %v399, %v633
        %v636 = vmul.f32 %v614, %v634
        %v637 = vmul.f32 %v615, %v634
        %v638 = vmul.f32 %v616, %v634
        %v639 = vmul.f32 %v617, %v634
        %v640 = vmul.f32 %v618, %v634
        %v641 = vmul.f32 %v619, %v634
        %v642 = vmul.f32 %v620, %v634
        %v643 = vmul.f32 %v621, %v634
        %v644 = vmul.f32 %v622, %v634
        %v645 = vmul.f32 %v623, %v634
        %v646 = vmul.f32 %v624, %v634
        %v647 = vmul.f32 %v625, %v634
        %v648 = vmul.f32 %v626, %v634
        %v649 = vmul.f32 %v627, %v634
        %v650 = vmul.f32 %v628, %v634
        %v651 = vmul.f32 %v629, %v634
        %v653 = vlaneseq
        %v654 = vshrl.u32 %v653, 7
        %v655 = vsub.s32 0, %v654
        %v656 = vrot.slane %v400, %v655
        %v658 = vadd.f32 %v636, %v656
        %v659 = vadd.f32 %v637, %v656
        %v660 = vadd.f32 %v638, %v656
        %v661 = vadd.f32 %v639, %v656
        %v662 = vadd.f32 %v640, %v656
        %v663 = vadd.f32 %v641, %v656
        %v664 = vadd.f32 %v642, %v656
        %v665 = vadd.f32 %v643, %v656
        %v666 = vadd.f32 %v644, %v656
        %v667 = vadd.f32 %v645, %v656
        %v668 = vadd.f32 %v646, %v656
        %v669 = vadd.f32 %v647, %v656
        %v670 = vadd.f32 %v648, %v656
        %v671 = vadd.f32 %v649, %v656
        %v672 = vadd.f32 %v650, %v656
        %v673 = vadd.f32 %v651, %v656
        %v674 = vpack.c.bf16 %v659, %v658
        %v675 = vpack.c.bf16 %v661, %v660
        %v676 = vpack.c.bf16 %v663, %v662
        %v677 = vpack.c.bf16 %v665, %v664
        %v678 = vpack.c.bf16 %v667, %v666
        %v679 = vpack.c.bf16 %v669, %v668
        %v680 = vpack.c.bf16 %v671, %v670
        %v681 = vpack.c.bf16 %v673, %v672
        %v682 = vld [vmem:[#allocation5] sm:$0xff]
        %v683 = vld [vmem:[#allocation5 + $0x8] sm:$0xff]
        %v684 = vld [vmem:[#allocation5 + $0x10] sm:$0xff]
        %v685 = vld [vmem:[#allocation5 + $0x18] sm:$0xff]
        %v686 = vld [vmem:[#allocation5 + $0x20] sm:$0xff]
        %v687 = vld [vmem:[#allocation5 + $0x28] sm:$0xff]
        %v688 = vld [vmem:[#allocation5 + $0x30] sm:$0xff]
        %v689 = vld [vmem:[#allocation5 + $0x38] sm:$0xff]
        %v690 = vld [vmem:[#allocation5 + $0x40] sm:$0xff]
        %v691 = vld [vmem:[#allocation5 + $0x48] sm:$0xff]
        %v692 = vld [vmem:[#allocation5 + $0x50] sm:$0xff]
        %v693 = vld [vmem:[#allocation5 + $0x58] sm:$0xff]
        %v694 = vld [vmem:[#allocation5 + $0x60] sm:$0xff]
        %v695 = vld [vmem:[#allocation5 + $0x68] sm:$0xff]
        %v696 = vld [vmem:[#allocation5 + $0x70] sm:$0xff]
        %v697 = vld [vmem:[#allocation5 + $0x78] sm:$0xff]
        %v699 = vlaneseq
        %v700 = vshrl.u32 %v699, 7
        %v701 = vsub.s32 0, %v700
        %v702 = vrot.slane %v403, %v701
        %v703 = vlaneseq
        %v704 = vshrl.u32 %v703, 7
        %v705 = vsub.s32 1, %v704
        %v706 = vrot.slane %v403, %v705
        %v725 = vunpack.c.l.b16 %v682
        %v726 = vunpack.c.h.b16 %v682
        %v727 = vunpack.c.l.b16 %v683
        %v728 = vunpack.c.h.b16 %v683
        %v729 = vunpack.c.l.b16 %v684
        %v730 = vunpack.c.h.b16 %v684
        %v731 = vunpack.c.l.b16 %v685
        %v732 = vunpack.c.h.b16 %v685
        %v733 = vunpack.c.l.b16 %v686
        %v734 = vunpack.c.h.b16 %v686
        %v735 = vunpack.c.l.b16 %v687
        %v736 = vunpack.c.h.b16 %v687
        %v737 = vunpack.c.l.b16 %v688
        %v738 = vunpack.c.h.b16 %v688
        %v739 = vunpack.c.l.b16 %v689
        %v740 = vunpack.c.h.b16 %v689
        %v741 = vunpack.c.l.b16 %v690
        %v742 = vunpack.c.h.b16 %v690
        %v743 = vunpack.c.l.b16 %v691
        %v744 = vunpack.c.h.b16 %v691
        %v745 = vunpack.c.l.b16 %v692
        %v746 = vunpack.c.h.b16 %v692
        %v747 = vunpack.c.l.b16 %v693
        %v748 = vunpack.c.h.b16 %v693
        %v749 = vunpack.c.l.b16 %v694
        %v750 = vunpack.c.h.b16 %v694
        %v751 = vunpack.c.l.b16 %v695
        %v752 = vunpack.c.h.b16 %v695
        %v753 = vunpack.c.l.b16 %v696
        %v754 = vunpack.c.h.b16 %v696
        %v755 = vunpack.c.l.b16 %v697
        %v756 = vunpack.c.h.b16 %v697
        %v757 = vpack.c.b16 %v727, %v725
        %v758 = vpack.c.b16 %v728, %v726
        %v759 = vpack.c.b16 %v731, %v729
        %v760 = vpack.c.b16 %v732, %v730
        %v761 = vpack.c.b16 %v735, %v733
        %v762 = vpack.c.b16 %v736, %v734
        %v763 = vpack.c.b16 %v739, %v737
        %v764 = vpack.c.b16 %v740, %v738
        %v765 = vpack.c.b16 %v743, %v741
        %v766 = vpack.c.b16 %v744, %v742
        %v767 = vpack.c.b16 %v747, %v745
        %v768 = vpack.c.b16 %v748, %v746
        %v769 = vpack.c.b16 %v751, %v749
        %v770 = vpack.c.b16 %v752, %v750
        %v771 = vpack.c.b16 %v755, %v753
        %v772 = vpack.c.b16 %v756, %v754
        %789 = vmatprep.subr.bf16.mxu0 %v758
        %790 = vmatpush1.bf16.msra.mxu0 %v757
        %791 = vmatprep.subr.bf16.mxu0 %v760
        %792 = vmatpush1.bf16.msra.mxu0 %v759
        %793 = vmatprep.subr.bf16.mxu0 %v762
        %794 = vmatpush1.bf16.msra.mxu0 %v761
        %795 = vmatprep.subr.bf16.mxu0 %v764
        %796 = vmatpush1.bf16.msra.mxu0 %v763
        %797 = vmatprep.subr.bf16.mxu0 %v766
        %798 = vmatpush1.bf16.msra.mxu0 %v765
        %799 = vmatprep.subr.bf16.mxu0 %v768
        %800 = vmatpush1.bf16.msra.mxu0 %v767
        %801 = vmatprep.subr.bf16.mxu0 %v770
        %802 = vmatpush1.bf16.msra.mxu0 %v769
        %803 = vmatprep.subr.bf16.mxu0 %v772
        %804 = vmatpush1.bf16.msra.mxu0 %v771
        %805 = vmatprep.subr.bf16.mxu0 0
        %806 = vmatpush1.bf16.msra.mxu0 0
        %807 = vmatprep.subr.bf16.mxu0 0
        %808 = vmatpush1.bf16.msra.mxu0 0
        %809 = vmatprep.subr.bf16.mxu0 0
        %810 = vmatpush1.bf16.msra.mxu0 0
        %811 = vmatprep.subr.bf16.mxu0 0
        %812 = vmatpush1.bf16.msra.mxu0 0
        %813 = vmatprep.subr.bf16.mxu0 0
        %814 = vmatpush1.bf16.msra.mxu0 0
        %815 = vmatprep.subr.bf16.mxu0 0
        %816 = vmatpush1.bf16.msra.mxu0 0
        %817 = vmatprep.subr.bf16.mxu0 0
        %818 = vmatpush1.bf16.msra.mxu0 0
        %819 = vmatprep.subr.bf16.mxu0 0
        %820 = vmatpush1.bf16.msra.mxu0 0
        %821 = vmatprep.mubr.bf16.mxu0 0
        %822 = vmatmul.mubr.bf16.gmra.mrb[0].mxu0 %v674
        %v823 = vpop.f32.mrb[0].mxu0
        %v824 = vadd.f32 %v702, %v823
        %v825 = vpop.f32.mrb[0].mxu0
        %v826 = vadd.f32 %v706, %v825
        %v827 = vpop.f32.mrb[0].mxu0
        %v828 = vadd.f32 %v702, %v827
        %v829 = vpop.f32.mrb[0].mxu0
        %v830 = vadd.f32 %v706, %v829
        %831 = vmatprep.mubr.bf16.mxu0 0
        %832 = vmatmul.mubr.bf16.gmra.mrb[0].mxu0 %v675
        %v833 = vpop.f32.mrb[0].mxu0
        %v834 = vadd.f32 %v702, %v833
        %v835 = vpop.f32.mrb[0].mxu0
        %v836 = vadd.f32 %v706, %v835
        %v837 = vpop.f32.mrb[0].mxu0
        %v838 = vadd.f32 %v702, %v837
        %v839 = vpop.f32.mrb[0].mxu0
        %v840 = vadd.f32 %v706, %v839
        %841 = vmatprep.mubr.bf16.mxu0 0
        %842 = vmatmul.mubr.bf16.gmra.mrb[0].mxu0 %v676
        %v843 = vpop.f32.mrb[0].mxu0
        %v844 = vadd.f32 %v702, %v843
        %v845 = vpop.f32.mrb[0].mxu0
        %v846 = vadd.f32 %v706, %v845
        %v847 = vpop.f32.mrb[0].mxu0
        %v848 = vadd.f32 %v702, %v847
        %v849 = vpop.f32.mrb[0].mxu0
        %v850 = vadd.f32 %v706, %v849
        %851 = vmatprep.mubr.bf16.mxu0 0
        %852 = vmatmul.mubr.bf16.gmra.mrb[0].mxu0 %v677
        %v853 = vpop.f32.mrb[0].mxu0
        %v854 = vadd.f32 %v702, %v853
        %v855 = vpop.f32.mrb[0].mxu0
        %v856 = vadd.f32 %v706, %v855
        %v857 = vpop.f32.mrb[0].mxu0
        %v858 = vadd.f32 %v702, %v857
        %v859 = vpop.f32.mrb[0].mxu0
        %v860 = vadd.f32 %v706, %v859
        %861 = vmatprep.mubr.bf16.mxu0 0
        %862 = vmatmul.mubr.bf16.gmra.mrb[0].mxu0 %v678
        %v863 = vpop.f32.mrb[0].mxu0
        %v864 = vadd.f32 %v702, %v863
        %v865 = vpop.f32.mrb[0].mxu0
        %v866 = vadd.f32 %v706, %v865
        %v867 = vpop.f32.mrb[0].mxu0
        %v868 = vadd.f32 %v702, %v867
        %v869 = vpop.f32.mrb[0].mxu0
        %v870 = vadd.f32 %v706, %v869
        %871 = vmatprep.mubr.bf16.mxu0 0
        %872 = vmatmul.mubr.bf16.gmra.mrb[0].mxu0 %v679
        %v873 = vpop.f32.mrb[0].mxu0
        %v874 = vadd.f32 %v702, %v873
        %v875 = vpop.f32.mrb[0].mxu0
        %v876 = vadd.f32 %v706, %v875
        %v877 = vpop.f32.mrb[0].mxu0
        %v878 = vadd.f32 %v702, %v877
        %v879 = vpop.f32.mrb[0].mxu0
        %v880 = vadd.f32 %v706, %v879
        %881 = vmatprep.mubr.bf16.mxu0 0
        %882 = vmatmul.mubr.bf16.gmra.mrb[0].mxu0 %v680
        %v883 = vpop.f32.mrb[0].mxu0
        %v884 = vadd.f32 %v702, %v883
        %v885 = vpop.f32.mrb[0].mxu0
        %v886 = vadd.f32 %v706, %v885
        %v887 = vpop.f32.mrb[0].mxu0
        %v888 = vadd.f32 %v702, %v887
        %v889 = vpop.f32.mrb[0].mxu0
        %v890 = vadd.f32 %v706, %v889
        %891 = vmatprep.mubr.bf16.mxu0 0
        %892 = vmatmul.mubr.bf16.gmra.mrb[0].mxu0 %v681
        %v893 = vpop.f32.mrb[0].mxu0
        %v894 = vadd.f32 %v702, %v893
        %v895 = vpop.f32.mrb[0].mxu0
        %v896 = vadd.f32 %v706, %v895
        %v897 = vpop.f32.mrb[0].mxu0
        %v898 = vadd.f32 %v702, %v897
        %v899 = vpop.f32.mrb[0].mxu0
        %v900 = vadd.f32 %v706, %v899
        %901 = vdwg.mxu0
        %v902 = vmax.f32 %v824, 0.0
        %v903 = vmax.f32 %v826, 0.0
        %v904 = vmax.f32 %v828, 0.0
        %v905 = vmax.f32 %v830, 0.0
        %v906 = vmax.f32 %v834, 0.0
        %v907 = vmax.f32 %v836, 0.0
        %v908 = vmax.f32 %v838, 0.0
        %v909 = vmax.f32 %v840, 0.0
        %v910 = vmax.f32 %v844, 0.0
        %v911 = vmax.f32 %v846, 0.0
        %v912 = vmax.f32 %v848, 0.0
        %v913 = vmax.f32 %v850, 0.0
        %v914 = vmax.f32 %v854, 0.0
        %v915 = vmax.f32 %v856, 0.0
        %v916 = vmax.f32 %v858, 0.0
        %v917 = vmax.f32 %v860, 0.0
        %v918 = vmax.f32 %v864, 0.0
        %v919 = vmax.f32 %v866, 0.0
        %v920 = vmax.f32 %v868, 0.0
        %v921 = vmax.f32 %v870, 0.0
        %v922 = vmax.f32 %v874, 0.0
        %v923 = vmax.f32 %v876, 0.0
        %v924 = vmax.f32 %v878, 0.0
        %v925 = vmax.f32 %v880, 0.0
        %v926 = vmax.f32 %v884, 0.0
        %v927 = vmax.f32 %v886, 0.0
        %v928 = vmax.f32 %v888, 0.0
        %v929 = vmax.f32 %v890, 0.0
        %v930 = vmax.f32 %v894, 0.0
        %v931 = vmax.f32 %v896, 0.0
        %v932 = vmax.f32 %v898, 0.0
        %v933 = vmax.f32 %v900, 0.0
        %v934 = vpack.c.bf16 %v904, %v902
        %v935 = vpack.c.bf16 %v905, %v903
        %v936 = vpack.c.bf16 %v908, %v906
        %v937 = vpack.c.bf16 %v909, %v907
        %v938 = vpack.c.bf16 %v912, %v910
        %v939 = vpack.c.bf16 %v913, %v911
        %v940 = vpack.c.bf16 %v916, %v914
        %v941 = vpack.c.bf16 %v917, %v915
        %v942 = vpack.c.bf16 %v920, %v918
        %v943 = vpack.c.bf16 %v921, %v919
        %v944 = vpack.c.bf16 %v924, %v922
        %v945 = vpack.c.bf16 %v925, %v923
        %v946 = vpack.c.bf16 %v928, %v926
        %v947 = vpack.c.bf16 %v929, %v927
        %v948 = vpack.c.bf16 %v932, %v930
        %v949 = vpack.c.bf16 %v933, %v931
        %v950 = vld [vmem:[#allocation7] sm:$0xf]
        %v951 = vld [vmem:[#allocation7 + $0x4] sm:$0xf]
        %v952 = vld [vmem:[#allocation7 + $0x8] sm:$0xf]
        %v953 = vld [vmem:[#allocation7 + $0xc] sm:$0xf]
        %v954 = vld [vmem:[#allocation7 + $0x10] sm:$0xf]
        %v955 = vld [vmem:[#allocation7 + $0x14] sm:$0xf]
        %v956 = vld [vmem:[#allocation7 + $0x18] sm:$0xf]
        %v957 = vld [vmem:[#allocation7 + $0x1c] sm:$0xf]
        %v958 = vld [vmem:[#allocation7 + $0x20] sm:$0xf]
        %v959 = vld [vmem:[#allocation7 + $0x24] sm:$0xf]
        %v960 = vld [vmem:[#allocation7 + $0x28] sm:$0xf]
        %v961 = vld [vmem:[#allocation7 + $0x2c] sm:$0xf]
        %v962 = vld [vmem:[#allocation7 + $0x30] sm:$0xf]
        %v963 = vld [vmem:[#allocation7 + $0x34] sm:$0xf]
        %v964 = vld [vmem:[#allocation7 + $0x38] sm:$0xf]
        %v965 = vld [vmem:[#allocation7 + $0x3c] sm:$0xf]
        %v966 = vld [vmem:[#allocation7 + $0x40] sm:$0xf]
        %v967 = vld [vmem:[#allocation7 + $0x44] sm:$0xf]
        %v968 = vld [vmem:[#allocation7 + $0x48] sm:$0xf]
        %v969 = vld [vmem:[#allocation7 + $0x4c] sm:$0xf]
        %v970 = vld [vmem:[#allocation7 + $0x50] sm:$0xf]
        %v971 = vld [vmem:[#allocation7 + $0x54] sm:$0xf]
        %v972 = vld [vmem:[#allocation7 + $0x58] sm:$0xf]
        %v973 = vld [vmem:[#allocation7 + $0x5c] sm:$0xf]
        %v974 = vld [vmem:[#allocation7 + $0x60] sm:$0xf]
        %v975 = vld [vmem:[#allocation7 + $0x64] sm:$0xf]
        %v976 = vld [vmem:[#allocation7 + $0x68] sm:$0xf]
        %v977 = vld [vmem:[#allocation7 + $0x6c] sm:$0xf]
        %v978 = vld [vmem:[#allocation7 + $0x70] sm:$0xf]
        %v979 = vld [vmem:[#allocation7 + $0x74] sm:$0xf]
        %v980 = vld [vmem:[#allocation7 + $0x78] sm:$0xf]
        %v981 = vld [vmem:[#allocation7 + $0x7c] sm:$0xf]
        %v983 = vlaneseq
        %v984 = vshrl.u32 %v983, 7
        %v985 = vsub.s32 0, %v984
        %v986 = vrot.slane %v404, %v985
        %v1020 = vunpack.c.l.b16 %v950
        %v1021 = vunpack.c.l.b16 %v951
        %v1022 = vunpack.c.l.b16 %v952
        %v1023 = vunpack.c.l.b16 %v953
        %v1024 = vunpack.c.l.b16 %v954
        %v1025 = vunpack.c.l.b16 %v955
        %v1026 = vunpack.c.l.b16 %v956
        %v1027 = vunpack.c.l.b16 %v957
        %v1028 = vunpack.c.l.b16 %v958
        %v1029 = vunpack.c.l.b16 %v959
        %v1030 = vunpack.c.l.b16 %v960
        %v1031 = vunpack.c.l.b16 %v961
        %v1032 = vunpack.c.l.b16 %v962
        %v1033 = vunpack.c.l.b16 %v963
        %v1034 = vunpack.c.l.b16 %v964
        %v1035 = vunpack.c.l.b16 %v965
        %v1036 = vunpack.c.l.b16 %v966
        %v1037 = vunpack.c.l.b16 %v967
        %v1038 = vunpack.c.l.b16 %v968
        %v1039 = vunpack.c.l.b16 %v969
        %v1040 = vunpack.c.l.b16 %v970
        %v1041 = vunpack.c.l.b16 %v971
        %v1042 = vunpack.c.l.b16 %v972
        %v1043 = vunpack.c.l.b16 %v973
        %v1044 = vunpack.c.l.b16 %v974
        %v1045 = vunpack.c.l.b16 %v975
        %v1046 = vunpack.c.l.b16 %v976
        %v1047 = vunpack.c.l.b16 %v977
        %v1048 = vunpack.c.l.b16 %v978
        %v1049 = vunpack.c.l.b16 %v979
        %v1050 = vunpack.c.l.b16 %v980
        %v1051 = vunpack.c.l.b16 %v981
        %v1052 = vpack.c.b16 %v1021, %v1020
        %v1053 = vpack.c.b16 %v1023, %v1022
        %v1054 = vpack.c.b16 %v1025, %v1024
        %v1055 = vpack.c.b16 %v1027, %v1026
        %v1056 = vpack.c.b16 %v1029, %v1028
        %v1057 = vpack.c.b16 %v1031, %v1030
        %v1058 = vpack.c.b16 %v1033, %v1032
        %v1059 = vpack.c.b16 %v1035, %v1034
        %v1060 = vpack.c.b16 %v1037, %v1036
        %v1061 = vpack.c.b16 %v1039, %v1038
        %v1062 = vpack.c.b16 %v1041, %v1040
        %v1063 = vpack.c.b16 %v1043, %v1042
        %v1064 = vpack.c.b16 %v1045, %v1044
        %v1065 = vpack.c.b16 %v1047, %v1046
        %v1066 = vpack.c.b16 %v1049, %v1048
        %v1067 = vpack.c.b16 %v1051, %v1050
        %1084 = vmatprep.subr.bf16.mxu0 0
        %1085 = vmatpush1.bf16.msra.mxu0 %v1052
        %1086 = vmatprep.subr.bf16.mxu0 0
        %1087 = vmatpush1.bf16.msra.mxu0 %v1053
        %1088 = vmatprep.subr.bf16.mxu0 0
        %1089 = vmatpush1.bf16.msra.mxu0 %v1054
        %1090 = vmatprep.subr.bf16.mxu0 0
        %1091 = vmatpush1.bf16.msra.mxu0 %v1055
        %1092 = vmatprep.subr.bf16.mxu0 0
        %1093 = vmatpush1.bf16.msra.mxu0 %v1056
        %1094 = vmatprep.subr.bf16.mxu0 0
        %1095 = vmatpush1.bf16.msra.mxu0 %v1057
        %1096 = vmatprep.subr.bf16.mxu0 0
        %1097 = vmatpush1.bf16.msra.mxu0 %v1058
        %1098 = vmatprep.subr.bf16.mxu0 0
        %1099 = vmatpush1.bf16.msra.mxu0 %v1059
        %1100 = vmatprep.subr.bf16.mxu0 0
        %1101 = vmatpush1.bf16.msra.mxu0 %v1060
        %1102 = vmatprep.subr.bf16.mxu0 0
        %1103 = vmatpush1.bf16.msra.mxu0 %v1061
        %1104 = vmatprep.subr.bf16.mxu0 0
        %1105 = vmatpush1.bf16.msra.mxu0 %v1062
        %1106 = vmatprep.subr.bf16.mxu0 0
        %1107 = vmatpush1.bf16.msra.mxu0 %v1063
        %1108 = vmatprep.subr.bf16.mxu0 0
        %1109 = vmatpush1.bf16.msra.mxu0 %v1064
        %1110 = vmatprep.subr.bf16.mxu0 0
        %1111 = vmatpush1.bf16.msra.mxu0 %v1065
        %1112 = vmatprep.subr.bf16.mxu0 0
        %1113 = vmatpush1.bf16.msra.mxu0 %v1066
        %1114 = vmatprep.subr.bf16.mxu0 0
        %1115 = vmatpush1.bf16.msra.mxu0 %v1067
        %1116 = vmatprep.mubr.bf16.mxu0 %v935
        %1117 = vmatmul.mubr.bf16.gmra.mrb[0].mxu0 %v934
        %v1118 = vpop.f32.mrb[0].mxu0
        %v1119 = vadd.f32 %v986, %v1118
        %v1120 = vpop.f32.mrb[0].mxu0
        %v1121 = vpop.f32.mrb[0].mxu0
        %v1122 = vadd.f32 %v986, %v1121
        %v1123 = vpop.f32.mrb[0].mxu0
        %1124 = vmatprep.mubr.bf16.mxu0 %v937
        %1125 = vmatmul.mubr.bf16.gmra.mrb[0].mxu0 %v936
        %v1126 = vpop.f32.mrb[0].mxu0
        %v1127 = vadd.f32 %v986, %v1126
        %v1128 = vpop.f32.mrb[0].mxu0
        %v1129 = vpop.f32.mrb[0].mxu0
        %v1130 = vadd.f32 %v986, %v1129
        %v1131 = vpop.f32.mrb[0].mxu0
        %1132 = vmatprep.mubr.bf16.mxu0 %v939
        %1133 = vmatmul.mubr.bf16.gmra.mrb[0].mxu0 %v938
        %v1134 = vpop.f32.mrb[0].mxu0
        %v1135 = vadd.f32 %v986, %v1134
        %v1136 = vpop.f32.mrb[0].mxu0
        %v1137 = vpop.f32.mrb[0].mxu0
        %v1138 = vadd.f32 %v986, %v1137
        %v1139 = vpop.f32.mrb[0].mxu0
        %1140 = vmatprep.mubr.bf16.mxu0 %v941
        %1141 = vmatmul.mubr.bf16.gmra.mrb[0].mxu0 %v940
        %v1142 = vpop.f32.mrb[0].mxu0
        %v1143 = vadd.f32 %v986, %v1142
        %v1144 = vpop.f32.mrb[0].mxu0
        %v1145 = vpop.f32.mrb[0].mxu0
        %v1146 = vadd.f32 %v986, %v1145
        %v1147 = vpop.f32.mrb[0].mxu0
        %1148 = vmatprep.mubr.bf16.mxu0 %v943
        %1149 = vmatmul.mubr.bf16.gmra.mrb[0].mxu0 %v942
        %v1150 = vpop.f32.mrb[0].mxu0
        %v1151 = vadd.f32 %v986, %v1150
        %v1152 = vpop.f32.mrb[0].mxu0
        %v1153 = vpop.f32.mrb[0].mxu0
        %v1154 = vadd.f32 %v986, %v1153
        %v1155 = vpop.f32.mrb[0].mxu0
        %1156 = vmatprep.mubr.bf16.mxu0 %v945
        %1157 = vmatmul.mubr.bf16.gmra.mrb[0].mxu0 %v944
        %v1158 = vpop.f32.mrb[0].mxu0
        %v1159 = vadd.f32 %v986, %v1158
        %v1160 = vpop.f32.mrb[0].mxu0
        %v1161 = vpop.f32.mrb[0].mxu0
        %v1162 = vadd.f32 %v986, %v1161
        %v1163 = vpop.f32.mrb[0].mxu0
        %1164 = vmatprep.mubr.bf16.mxu0 %v947
        %1165 = vmatmul.mubr.bf16.gmra.mrb[0].mxu0 %v946
        %v1166 = vpop.f32.mrb[0].mxu0
        %v1167 = vadd.f32 %v986, %v1166
        %v1168 = vpop.f32.mrb[0].mxu0
        %v1169 = vpop.f32.mrb[0].mxu0
        %v1170 = vadd.f32 %v986, %v1169
        %v1171 = vpop.f32.mrb[0].mxu0
        %1172 = vmatprep.mubr.bf16.mxu0 %v949
        %1173 = vmatmul.mubr.bf16.gmra.mrb[0].mxu0 %v948
        %v1174 = vpop.f32.mrb[0].mxu0
        %v1175 = vadd.f32 %v986, %v1174
        %v1176 = vpop.f32.mrb[0].mxu0
        %v1177 = vpop.f32.mrb[0].mxu0
        %v1178 = vadd.f32 %v986, %v1177
        %v1179 = vpop.f32.mrb[0].mxu0
        %1180 = vdwg.mxu0
        %v1181 = vadd.f32 %v658, %v1119
        %v1182 = vadd.f32 %v659, %v1122
        %v1183 = vadd.f32 %v660, %v1127
        %v1184 = vadd.f32 %v661, %v1130
        %v1185 = vadd.f32 %v662, %v1135
        %v1186 = vadd.f32 %v663, %v1138
        %v1187 = vadd.f32 %v664, %v1143
        %v1188 = vadd.f32 %v665, %v1146
        %v1189 = vadd.f32 %v666, %v1151
        %v1190 = vadd.f32 %v667, %v1154
        %v1191 = vadd.f32 %v668, %v1159
        %v1192 = vadd.f32 %v669, %v1162
        %v1193 = vadd.f32 %v670, %v1167
        %v1194 = vadd.f32 %v671, %v1170
        %v1195 = vadd.f32 %v672, %v1175
        %v1196 = vadd.f32 %v673, %v1178
        %1197 = vadd.xlane.f32.xlu0 %v1181
        %v1198 = vpop.xlane.xlu0 %1197
        %1199 = vadd.xlane.f32.xlu0 %v1182
        %v1200 = vpop.xlane.xlu0 %1199
        %1201 = vadd.xlane.f32.xlu0 %v1183
        %v1202 = vpop.xlane.xlu0 %1201
        %1203 = vadd.xlane.f32.xlu0 %v1184
        %v1204 = vpop.xlane.xlu0 %1203
        %1205 = vadd.xlane.f32.xlu0 %v1185
        %v1206 = vpop.xlane.xlu0 %1205
        %1207 = vadd.xlane.f32.xlu0 %v1186
        %v1208 = vpop.xlane.xlu0 %1207
        %1209 = vadd.xlane.f32.xlu0 %v1187
        %v1210 = vpop.xlane.xlu0 %1209
        %1211 = vadd.xlane.f32.xlu0 %v1188
        %v1212 = vpop.xlane.xlu0 %1211
        %1213 = vadd.xlane.f32.xlu0 %v1189
        %v1214 = vpop.xlane.xlu0 %1213
        %1215 = vadd.xlane.f32.xlu0 %v1190
        %v1216 = vpop.xlane.xlu0 %1215
        %1217 = vadd.xlane.f32.xlu0 %v1191
        %v1218 = vpop.xlane.xlu0 %1217
        %1219 = vadd.xlane.f32.xlu0 %v1192
        %v1220 = vpop.xlane.xlu0 %1219
        %1221 = vadd.xlane.f32.xlu0 %v1193
        %v1222 = vpop.xlane.xlu0 %1221
        %1223 = vadd.xlane.f32.xlu0 %v1194
        %v1224 = vpop.xlane.xlu0 %1223
        %1225 = vadd.xlane.f32.xlu0 %v1195
        %v1226 = vpop.xlane.xlu0 %1225
        %1227 = vadd.xlane.f32.xlu0 %v1196
        %v1228 = vpop.xlane.xlu0 %1227
        %v1229 = vmul.f32 %v1198, %v437
        %v1230 = vmul.f32 %v1200, %v437
        %v1231 = vmul.f32 %v1202, %v437
        %v1232 = vmul.f32 %v1204, %v437
        %v1233 = vmul.f32 %v1206, %v437
        %v1234 = vmul.f32 %v1208, %v437
        %v1235 = vmul.f32 %v1210, %v437
        %v1236 = vmul.f32 %v1212, %v437
        %v1237 = vmul.f32 %v1214, %v437
        %v1238 = vmul.f32 %v1216, %v437
        %v1239 = vmul.f32 %v1218, %v437
        %v1240 = vmul.f32 %v1220, %v437
        %v1241 = vmul.f32 %v1222, %v437
        %v1242 = vmul.f32 %v1224, %v437
        %v1243 = vmul.f32 %v1226, %v437
        %v1244 = vmul.f32 %v1228, %v437
        %v1245 = vmul.f32 %v1181, %v1181
        %v1246 = vmul.f32 %v1182, %v1182
        %v1247 = vmul.f32 %v1183, %v1183
        %v1248 = vmul.f32 %v1184, %v1184
        %v1249 = vmul.f32 %v1185, %v1185
        %v1250 = vmul.f32 %v1186, %v1186
        %v1251 = vmul.f32 %v1187, %v1187
        %v1252 = vmul.f32 %v1188, %v1188
        %v1253 = vmul.f32 %v1189, %v1189
        %v1254 = vmul.f32 %v1190, %v1190
        %v1255 = vmul.f32 %v1191, %v1191
        %v1256 = vmul.f32 %v1192, %v1192
        %v1257 = vmul.f32 %v1193, %v1193
        %v1258 = vmul.f32 %v1194, %v1194
        %v1259 = vmul.f32 %v1195, %v1195
        %v1260 = vmul.f32 %v1196, %v1196
        %1261 = vadd.xlane.f32.xlu0 %v1245
        %v1262 = vpop.xlane.xlu0 %1261
        %1263 = vadd.xlane.f32.xlu0 %v1246
        %v1264 = vpop.xlane.xlu0 %1263
        %1265 = vadd.xlane.f32.xlu0 %v1247
        %v1266 = vpop.xlane.xlu0 %1265
        %1267 = vadd.xlane.f32.xlu0 %v1248
        %v1268 = vpop.xlane.xlu0 %1267
        %1269 = vadd.xlane.f32.xlu0 %v1249
        %v1270 = vpop.xlane.xlu0 %1269
        %1271 = vadd.xlane.f32.xlu0 %v1250
        %v1272 = vpop.xlane.xlu0 %1271
        %1273 = vadd.xlane.f32.xlu0 %v1251
        %v1274 = vpop.xlane.xlu0 %1273
        %1275 = vadd.xlane.f32.xlu0 %v1252
        %v1276 = vpop.xlane.xlu0 %1275
        %1277 = vadd.xlane.f32.xlu0 %v1253
        %v1278 = vpop.xlane.xlu0 %1277
        %1279 = vadd.xlane.f32.xlu0 %v1254
        %v1280 = vpop.xlane.xlu0 %1279
        %1281 = vadd.xlane.f32.xlu0 %v1255
        %v1282 = vpop.xlane.xlu0 %1281
        %1283 = vadd.xlane.f32.xlu0 %v1256
        %v1284 = vpop.xlane.xlu0 %1283
        %1285 = vadd.xlane.f32.xlu0 %v1257
        %v1286 = vpop.xlane.xlu0 %1285
        %1287 = vadd.xlane.f32.xlu0 %v1258
        %v1288 = vpop.xlane.xlu0 %1287
        %1289 = vadd.xlane.f32.xlu0 %v1259
        %v1290 = vpop.xlane.xlu0 %1289
        %1291 = vadd.xlane.f32.xlu0 %v1260
        %v1292 = vpop.xlane.xlu0 %1291
        %v1293 = vmul.f32 %v1262, %v437
        %v1294 = vmul.f32 %v1264, %v437
        %v1295 = vmul.f32 %v1266, %v437
        %v1296 = vmul.f32 %v1268, %v437
        %v1297 = vmul.f32 %v1270, %v437
        %v1298 = vmul.f32 %v1272, %v437
        %v1299 = vmul.f32 %v1274, %v437
        %v1300 = vmul.f32 %v1276, %v437
        %v1301 = vmul.f32 %v1278, %v437
        %v1302 = vmul.f32 %v1280, %v437
        %v1303 = vmul.f32 %v1282, %v437
        %v1304 = vmul.f32 %v1284, %v437
        %v1305 = vmul.f32 %v1286, %v437
        %v1306 = vmul.f32 %v1288, %v437
        %v1307 = vmul.f32 %v1290, %v437
        %v1308 = vmul.f32 %v1292, %v437
        %v1309 = vmul.f32 %v1229, %v1229
        %v1310 = vmul.f32 %v1230, %v1230
        %v1311 = vmul.f32 %v1231, %v1231
        %v1312 = vmul.f32 %v1232, %v1232
        %v1313 = vmul.f32 %v1233, %v1233
        %v1314 = vmul.f32 %v1234, %v1234
        %v1315 = vmul.f32 %v1235, %v1235
        %v1316 = vmul.f32 %v1236, %v1236
        %v1317 = vmul.f32 %v1237, %v1237
        %v1318 = vmul.f32 %v1238, %v1238
        %v1319 = vmul.f32 %v1239, %v1239
        %v1320 = vmul.f32 %v1240, %v1240
        %v1321 = vmul.f32 %v1241, %v1241
        %v1322 = vmul.f32 %v1242, %v1242
        %v1323 = vmul.f32 %v1243, %v1243
        %v1324 = vmul.f32 %v1244, %v1244
        %v1325 = vsub.f32 %v1293, %v1309
        %v1326 = vsub.f32 %v1294, %v1310
        %v1327 = vsub.f32 %v1295, %v1311
        %v1328 = vsub.f32 %v1296, %v1312
        %v1329 = vsub.f32 %v1297, %v1313
        %v1330 = vsub.f32 %v1298, %v1314
        %v1331 = vsub.f32 %v1299, %v1315
        %v1332 = vsub.f32 %v1300, %v1316
        %v1333 = vsub.f32 %v1301, %v1317
        %v1334 = vsub.f32 %v1302, %v1318
        %v1335 = vsub.f32 %v1303, %v1319
        %v1336 = vsub.f32 %v1304, %v1320
        %v1337 = vsub.f32 %v1305, %v1321
        %v1338 = vsub.f32 %v1306, %v1322
        %v1339 = vsub.f32 %v1307, %v1323
        %v1340 = vsub.f32 %v1308, %v1324
        %v1341 = vmax.f32 %v1325, 0.0
        %v1342 = vmax.f32 %v1326, 0.0
        %v1343 = vmax.f32 %v1327, 0.0
        %v1344 = vmax.f32 %v1328, 0.0
        %v1345 = vmax.f32 %v1329, 0.0
        %v1346 = vmax.f32 %v1330, 0.0
        %v1347 = vmax.f32 %v1331, 0.0
        %v1348 = vmax.f32 %v1332, 0.0
        %v1349 = vmax.f32 %v1333, 0.0
        %v1350 = vmax.f32 %v1334, 0.0
        %v1351 = vmax.f32 %v1335, 0.0
        %v1352 = vmax.f32 %v1336, 0.0
        %v1353 = vmax.f32 %v1337, 0.0
        %v1354 = vmax.f32 %v1338, 0.0
        %v1355 = vmax.f32 %v1339, 0.0
        %v1356 = vmax.f32 %v1340, 0.0
        %v1357 = vadd.f32 %v1341, 1e-05
        %v1358 = vadd.f32 %v1342, 1e-05
        %v1359 = vadd.f32 %v1343, 1e-05
        %v1360 = vadd.f32 %v1344, 1e-05
        %v1361 = vadd.f32 %v1345, 1e-05
        %v1362 = vadd.f32 %v1346, 1e-05
        %v1363 = vadd.f32 %v1347, 1e-05
        %v1364 = vadd.f32 %v1348, 1e-05
        %v1365 = vadd.f32 %v1349, 1e-05
        %v1366 = vadd.f32 %v1350, 1e-05
        %v1367 = vadd.f32 %v1351, 1e-05
        %v1368 = vadd.f32 %v1352, 1e-05
        %v1369 = vadd.f32 %v1353, 1e-05
        %v1370 = vadd.f32 %v1354, 1e-05
        %v1371 = vadd.f32 %v1355, 1e-05
        %v1372 = vadd.f32 %v1356, 1e-05
        %v1373 = vrsqrt.pop %v1357
        %v1374 = vrsqrt.pop %v1358
        %v1375 = vrsqrt.pop %v1359
        %v1376 = vrsqrt.pop %v1360
        %v1377 = vrsqrt.pop %v1361
        %v1378 = vrsqrt.pop %v1362
        %v1379 = vrsqrt.pop %v1363
        %v1380 = vrsqrt.pop %v1364
        %v1381 = vrsqrt.pop %v1365
        %v1382 = vrsqrt.pop %v1366
        %v1383 = vrsqrt.pop %v1367
        %v1384 = vrsqrt.pop %v1368
        %v1385 = vrsqrt.pop %v1369
        %v1386 = vrsqrt.pop %v1370
        %v1387 = vrsqrt.pop %v1371
        %v1388 = vrsqrt.pop %v1372
        %v1389 = vsub.f32 %v1181, %v1229
        %v1390 = vsub.f32 %v1182, %v1230
        %v1391 = vsub.f32 %v1183, %v1231
        %v1392 = vsub.f32 %v1184, %v1232
        %v1393 = vsub.f32 %v1185, %v1233
        %v1394 = vsub.f32 %v1186, %v1234
        %v1395 = vsub.f32 %v1187, %v1235
        %v1396 = vsub.f32 %v1188, %v1236
        %v1397 = vsub.f32 %v1189, %v1237
        %v1398 = vsub.f32 %v1190, %v1238
        %v1399 = vsub.f32 %v1191, %v1239
        %v1400 = vsub.f32 %v1192, %v1240
        %v1401 = vsub.f32 %v1193, %v1241
        %v1402 = vsub.f32 %v1194, %v1242
        %v1403 = vsub.f32 %v1195, %v1243
        %v1404 = vsub.f32 %v1196, %v1244
        %v1405 = vmul.f32 %v1389, %v1373
        %v1406 = vmul.f32 %v1390, %v1374
        %v1407 = vmul.f32 %v1391, %v1375
        %v1408 = vmul.f32 %v1392, %v1376
        %v1409 = vmul.f32 %v1393, %v1377
        %v1410 = vmul.f32 %v1394, %v1378
        %v1411 = vmul.f32 %v1395, %v1379
        %v1412 = vmul.f32 %v1396, %v1380
        %v1413 = vmul.f32 %v1397, %v1381
        %v1414 = vmul.f32 %v1398, %v1382
        %v1415 = vmul.f32 %v1399, %v1383
        %v1416 = vmul.f32 %v1400, %v1384
        %v1417 = vmul.f32 %v1401, %v1385
        %v1418 = vmul.f32 %v1402, %v1386
        %v1419 = vmul.f32 %v1403, %v1387
        %v1420 = vmul.f32 %v1404, %v1388
        %v1422 = vlaneseq
        %v1423 = vshrl.u32 %v1422, 7
        %v1424 = vsub.s32 0, %v1423
        %v1425 = vrot.slane %v401, %v1424
        %v1427 = vmul.f32 %v1405, %v1425
        %v1428 = vmul.f32 %v1406, %v1425
        %v1429 = vmul.f32 %v1407, %v1425
        %v1430 = vmul.f32 %v1408, %v1425
        %v1431 = vmul.f32 %v1409, %v1425
        %v1432 = vmul.f32 %v1410, %v1425
        %v1433 = vmul.f32 %v1411, %v1425
        %v1434 = vmul.f32 %v1412, %v1425
        %v1435 = vmul.f32 %v1413, %v1425
        %v1436 = vmul.f32 %v1414, %v1425
        %v1437 = vmul.f32 %v1415, %v1425
        %v1438 = vmul.f32 %v1416, %v1425
        %v1439 = vmul.f32 %v1417, %v1425
        %v1440 = vmul.f32 %v1418, %v1425
        %v1441 = vmul.f32 %v1419, %v1425
        %v1442 = vmul.f32 %v1420, %v1425
        %v1444 = vlaneseq
        %v1445 = vshrl.u32 %v1444, 7
        %v1446 = vsub.s32 0, %v1445
        %v1447 = vrot.slane %v402, %v1446
        %v1449 = vadd.f32 %v1427, %v1447
        %v1450 = vadd.f32 %v1428, %v1447
        %v1451 = vadd.f32 %v1429, %v1447
        %v1452 = vadd.f32 %v1430, %v1447
        %v1453 = vadd.f32 %v1431, %v1447
        %v1454 = vadd.f32 %v1432, %v1447
        %v1455 = vadd.f32 %v1433, %v1447
        %v1456 = vadd.f32 %v1434, %v1447
        %v1457 = vadd.f32 %v1435, %v1447
        %v1458 = vadd.f32 %v1436, %v1447
        %v1459 = vadd.f32 %v1437, %v1447
        %v1460 = vadd.f32 %v1438, %v1447
        %v1461 = vadd.f32 %v1439, %v1447
        %v1462 = vadd.f32 %v1440, %v1447
        %v1463 = vadd.f32 %v1441, %v1447
        %v1464 = vadd.f32 %v1442, %v1447
        %1465 = vst [vmem:[%s379] sm:$0xff] %v1449
        %1466 = vst [vmem:[%s379 + $0x8] sm:$0xff] %v1450
        %1467 = vst [vmem:[%s379 + $0x10] sm:$0xff] %v1451
        %1468 = vst [vmem:[%s379 + $0x18] sm:$0xff] %v1452
        %1469 = vst [vmem:[%s379 + $0x20] sm:$0xff] %v1453
        %1470 = vst [vmem:[%s379 + $0x28] sm:$0xff] %v1454
        %1471 = vst [vmem:[%s379 + $0x30] sm:$0xff] %v1455
        %1472 = vst [vmem:[%s379 + $0x38] sm:$0xff] %v1456
        %1473 = vst [vmem:[%s379 + $0x40] sm:$0xff] %v1457
        %1474 = vst [vmem:[%s379 + $0x48] sm:$0xff] %v1458
        %1475 = vst [vmem:[%s379 + $0x50] sm:$0xff] %v1459
        %1476 = vst [vmem:[%s379 + $0x58] sm:$0xff] %v1460
        %1477 = vst [vmem:[%s379 + $0x60] sm:$0xff] %v1461
        %1478 = vst [vmem:[%s379 + $0x68] sm:$0xff] %v1462
        %1479 = vst [vmem:[%s379 + $0x70] sm:$0xff] %v1463
        %1480 = vst [vmem:[%s379 + $0x78] sm:$0xff] %v1464
        %s1481 = sand.u32 %s229, 1
        %s1482 = scalar_lea.sflag [#allocation4], %s1481
        %s1483 = sand.u32 %s229, 1
        %s1484 = smul.addr %s1483, 128
        %s1485 = scalar_lea.vmem [#allocation8], %s1484
        // Predicated region
        $region69: #{tpu_custom_call.1} parent=55 // pred_check
          %p1486 = pneg %p239
        $region70: #{tpu_custom_call.1} parent=55 // pred_check_branch
          %1488 = sbr.rel (%p1486) target = $region72
        $region71: #{tpu_custom_call.1} parent=55 // pred_region
          %s1489 = smul.u32 16, %s27
          %s1491 = ssub.s32 2048, 2048
          %1492 = vsyncadd %s1482, %s1491
          %s1493 = smul.addr %s1489, 128
          %s1494 = scalar_lea.hbm %s9, %s1493
          %s1495 = sshll.u32 %s1485, 4
          %s1496 = int_to_ptr.vmem [resolvable:$true] %s1495
          %1501 = dma.vmem_to_hbm [thread:$0]  %s1496, 2048, %s1494, %s1482, 128, 128, 8
        $region72: #{tpu_custom_call.1} parent=55 // pred_fallthru
          _
      $region56: #{tpu_custom_call.1} parent=5 // pred_fallthru
        _
      %p1502 = scmp.le.s32.totalorder 2, %s22
      // Predicated region
      $region73: #{tpu_custom_call.1} parent=5 // pred_check
        %p1503 = pneg %p1502
      $region74: #{tpu_custom_call.1} parent=5 // pred_check_branch
        %1505 = sbr.rel (%p1503) target = $region76
      $region75: #{tpu_custom_call.1} parent=5 // pred_region
        %s1506 = ssub.s32 %s22, 2
        // Predicated region
        $region77: #{tpu_custom_call.1} parent=75 // pred_check
          %p1507 = pneg %p245
        $region78: #{tpu_custom_call.1} parent=75 // pred_check_branch
          %1509 = sbr.rel (%p1507) target = $region80
        $region79: #{tpu_custom_call.1} parent=75 // pred_region
          %s1510 = sand.u32 %s230, 1
          %s1511 = scalar_lea.sflag [#allocation4], %s1510
          %s1512 = sand.u32 %s230, 1
          %s1513 = smul.addr %s1512, 128
          %s1514 = scalar_lea.vmem [#allocation8], %s1513
          %1515 = dma.done %s1511, 2048
        $region80: #{tpu_custom_call.1} parent=75 // pred_fallthru
          _
      $region76: #{tpu_custom_call.1} parent=5 // pred_fallthru
        _
    $region6: #{tpu_custom_call.1} parent=1 // loop_footer
      %s26 = sadd.s32 1, %s22
    $region7: #{tpu_custom_call.1} parent=1 // loop_footer_branch
      %21 = sbr.rel target = $region3
    $region8: #{tpu_custom_call.1} parent=1 // loop_exit
      _
    %1516 = vsyncpa [#allocation3], 1
    %s1517 = scalar_lea.sflag [#allocation3], 1
    %1518 = vsyncpa %s1517, 1
    %1519 = vsyncpa [#allocation6], 1
    %1520 = vsyncpa [#allocation4], 1
    %s1521 = scalar_lea.sflag [#allocation4], 1
    %1522 = vsyncpa %s1521, 1

</llo_original>
